<compile_context>
chip_gen: v7x
topology: tpu7x:2x2x1
jax: 0.10.0
libtpu: 0.0.40
codegen_flags: <defaults>
</compile_context>

<pallas_src>
import functools
import math

import jax
import jax.numpy as jnp
from jax.experimental import pallas as pl
from jax.experimental.pallas import tpu as pltpu


# ---------------------------------------------------------------------------
# Flash-style softmax self-attention kernel (SoftmaxSelfAttention.forward)
# ---------------------------------------------------------------------------

def _flash_attn_kernel(flags_ref, bias_ref, q_ref, k_ref, v_ref, o_ref,
                       m_scr, l_scr, acc_scr,
                       *, matmul_dtype, exp_dtype, approx_recip):
    """One (batch, q-tile, kv-tile) grid step; heads unrolled statically.

    flags_ref : SMEM (B, n_kv) int32   1 = compute this kv tile, 0 = skip it
    bias_ref  : VMEM (1, n_kv, tk) f32 additive mask bias, resident per batch
    q_ref     : (1, tq, H*D)           k_ref / v_ref : (1, tk, H*D)
    o_ref     : (1, tq, H*D)           lane-dense output slab
    m_scr / l_scr : (H, tq, 128) f32   lane-replicated running max / sum
    acc_scr       : (H, tq, D)   f32   output accumulator
    """
    b = pl.program_id(0)
    ki = pl.program_id(2)
    H, _, D = acc_scr.shape

    @pl.when(ki == 0)
    def _init():
        m_scr[...] = jnp.full_like(m_scr, -jnp.inf)
        l_scr[...] = jnp.zeros_like(l_scr)
        acc_scr[...] = jnp.zeros_like(acc_scr)

    @pl.when(flags_ref[b, ki] > 0)            # skip fully-masked kv tiles
    def _compute():
        # Additive mask bias (0 on valid keys, -1e6 on masked keys): one
        # resident row set per batch, dynamically sliced on the sublane axis.
        bias = bias_ref[0, pl.ds(ki, 1), :]                      # (1, tk) f32

        # Static unroll over heads: plain 2-D MXU matmuls on lane slices of
        # the (tq, H*D)/(tk, H*D) blocks -- no in-kernel transposes and no
        # XLA-side (B,S,H,D)->(B,H,S,D) HBM round trips.
        for h in range(H):
            sl = slice(h * D, (h + 1) * D)
            q = q_ref[0, :, sl].astype(matmul_dtype)             # (tq, D)
            k = k_ref[0, :, sl].astype(matmul_dtype)             # (tk, D)
            v = v_ref[0, :, sl].astype(matmul_dtype)             # (tk, D)

            # Q K^T with f32 accumulation on the MXU; 1/sqrt(D) is already
            # folded into the Q projection weights in the wrapper.
            s = jax.lax.dot_general(q, k, (((1,), (1,)), ((), ())),
                                    preferred_element_type=jnp.float32)
            s = s + bias                                         # (tq, tk)

            # Online softmax update (running stats f32, lane-replicated).
            m_prev = m_scr[h]                                    # (tq, 128)
            m_next = jnp.maximum(m_prev, jnp.max(s, axis=-1, keepdims=True))
            alpha = jnp.exp(m_prev - m_next)
            p = jnp.exp((s - m_next[:, 0:1]).astype(exp_dtype))  # (tq, tk)

            l_scr[h] = alpha * l_scr[h] + jnp.sum(
                p.astype(jnp.float32), axis=-1, keepdims=True)
            acc_scr[h] = alpha[:, 0:1] * acc_scr[h] + jax.lax.dot_general(
                p.astype(matmul_dtype), v, (((1,), (0,)), ((), ())),
                preferred_element_type=jnp.float32)
            m_scr[h] = m_next

    @pl.when(ki == pl.num_programs(2) - 1)
    def _finalize():
        outs = []
        for h in range(H):
            inv_l = pl.reciprocal(l_scr[h][:, 0:1], approx=approx_recip)
            outs.append(acc_scr[h] * inv_l)                      # (tq, D) f32
        # Lane-dense (tq, H*D) slab -> one dense store / dense output DMA.
        o_ref[0] = jnp.concatenate(outs, axis=-1).astype(o_ref.dtype)


def _round_up(x, m):
    return ((x + m - 1) // m) * m


def _choose_blocks(S, H, q_block, kv_block):
    """Default tiles: target 256 rows; cap kv at 128 for very wide H so the
    per-step score/prob working set stays within the v7x 64 MiB VMEM budget.
    Short sequences round up to a multiple of 8 (padded rows are masked)."""
    if q_block is None:
        q_block = 256 if S >= 256 else _round_up(S, 8)
    if kv_block is None:
        kv_target = 128 if H >= 12 else 256
        kv_block = kv_target if S >= kv_target else _round_up(S, 8)
    return q_block, kv_block


def _vmem_limit_bytes(H, D, tq, tk, n_kv, io_bytes, kv_buffers):
    """Scoped-VMEM budget, re-derived per call and capped per generation."""
    lane = 128
    hd_p = _round_up(H * D, lane)
    d_p = _round_up(D, lane)
    tk_p = _round_up(tk, lane)
    est = (2 * tq * hd_p * io_bytes                     # double-buffered Q tile
           + 2 * kv_buffers * tk * hd_p * io_bytes      # K + V tile buffers
           + 2 * tq * hd_p * io_bytes                   # double-buffered output
           + _round_up(n_kv, 8) * tk_p * 4              # resident mask bias
           + (2 * H * tq * lane + H * tq * d_p) * 4     # m/l/acc scratch
           + 6 * tq * tk_p * 4)                         # score/prob temporaries
    try:
        phys = int(pltpu.get_tpu_info().vmem_capacity_bytes)
    except Exception:
        phys = 64 * 1024 * 1024                         # v7x per-core floor
    cap = (phys * 3) // 4                               # leave compiler headroom
    return int(min(max(int(est * 1.5), 16 * 1024 * 1024), cap))


def flash_softmax_attention(Q, K, V, mask, *, head_dim,
                            io_dtype=None, matmul_dtype=jnp.bfloat16,
                            exp_dtype=jnp.float32, approx_recip=True,
                            q_block=None, kv_block=None, kv_buffering=None):
    """Pallas flash-attention equivalent of SoftmaxSelfAttention.forward
    (output_QK=False; attention dropout is an inference identity).

    Q, K, V : (B, S, H*D), heads packed on the last axis; 1/sqrt(head_dim)
              must already be folded into Q.
    mask    : (B, S), 1.0 = keep, 0.0 = masked key.
    Returns : (B, S, H*D) in io_dtype (lane-dense; heads already merged).

    io_dtype/matmul_dtype = bf16 is the perf configuration (bf16 DMA + MXU,
    f32 softmax/accumulation); pass float32 for both for strict f32
    validation.  exp_dtype=bfloat16 moves the exp stream to the bf16 EUP
    path (v6e/v7x only).  kv_buffering gives deeper K/V pipelining (v5e).
    """
    B, S, HD = Q.shape
    H = HD // head_dim
    D = head_dim
    assert H * D == HD, (HD, head_dim)
    if io_dtype is None:
        io_dtype = Q.dtype

    q_block, kv_block = _choose_blocks(S, H, q_block, kv_block)
    lcm = q_block * kv_block // math.gcd(q_block, kv_block)
    S_pad = _round_up(S, lcm)
    assert q_block % 8 == 0 or q_block == S_pad, (q_block, S_pad)
    assert kv_block % 8 == 0 or kv_block == S_pad, (kv_block, S_pad)

    # Pad with masked rows instead of ever falling back to full-extent tiles.
    if S_pad != S:
        pad = S_pad - S
        Q = jnp.pad(Q, ((0, 0), (0, pad), (0, 0)))
        K = jnp.pad(K, ((0, 0), (0, pad), (0, 0)))
        V = jnp.pad(V, ((0, 0), (0, pad), (0, 0)))
        mask = jnp.pad(mask, ((0, 0), (0, pad)))

    Q = Q.astype(io_dtype)
    K = K.astype(io_dtype)
    V = V.astype(io_dtype)

    n_q = S_pad // q_block
    n_kv = S_pad // kv_block

    maskf = mask.astype(jnp.float32)
    # Precomputed additive bias, resident per batch inside the kernel.
    bias = ((maskf - 1.0) * 1000000.0).reshape(B, n_kv, kv_block)
    # Per-(batch, kv-tile) skip flags (scalar-prefetched to SMEM): 0 = tile is
    # fully masked and safely skippable, 1 = compute.  Rows with no valid key
    # keep every tile on the compute path so they match the reference softmax.
    tile_valid = maskf.reshape(B, n_kv, kv_block).max(axis=-1) > 0.0
    row_valid = maskf.max(axis=-1) > 0.0
    flags = (tile_valid | ~row_valid[:, None]).astype(jnp.int32)

    kernel = functools.partial(_flash_attn_kernel, matmul_dtype=matmul_dtype,
                               exp_dtype=exp_dtype, approx_recip=approx_recip)

    kv_shape = (1, kv_block, HD)
    kv_index = lambda b, qi, ki, fl: (b, ki, 0)
    kv_kwargs = ({} if kv_buffering is None
                 else dict(pipeline_mode=pl.Buffered(kv_buffering)))
    k_spec = pl.BlockSpec(kv_shape, kv_index, **kv_kwargs)
    v_spec = pl.BlockSpec(kv_shape, kv_index, **kv_kwargs)

    io_bytes = jnp.dtype(io_dtype).itemsize
    out = pl.pallas_call(
        kernel,
        out_shape=jax.ShapeDtypeStruct((B, S_pad, HD), io_dtype),
        grid_spec=pltpu.PrefetchScalarGridSpec(
            num_scalar_prefetch=1,
            grid=(B, n_q, n_kv),
            in_specs=[
                pl.BlockSpec((1, n_kv, kv_block),        # mask bias, resident
                             lambda b, qi, ki, fl: (b, 0, 0)),
                pl.BlockSpec((1, q_block, HD),
                             lambda b, qi, ki, fl: (b, qi, 0)),
                k_spec,
                v_spec,
            ],
            out_specs=pl.BlockSpec((1, q_block, HD),
                                   lambda b, qi, ki, fl: (b, qi, 0)),
            scratch_shapes=[
                pltpu.VMEM((H, q_block, 128), jnp.float32),   # running max
                pltpu.VMEM((H, q_block, 128), jnp.float32),   # running sum
                pltpu.VMEM((H, q_block, D), jnp.float32),     # output accumulator
            ]),
        compiler_params=pltpu.CompilerParams(
            dimension_semantics=("parallel", "parallel", "arbitrary"),
            vmem_limit_bytes=_vmem_limit_bytes(
                H, D, q_block, kv_block, n_kv, io_bytes,
                2 if kv_buffering is None else kv_buffering)),
    )(flags, bias, Q, K, V)

    return out[:, :S, :] if S_pad != S else out


# ---------------------------------------------------------------------------
# Pure-JAX reference attention and the full Block forward
# ---------------------------------------------------------------------------

def reference_softmax_attention(Q, K, V, mask, head_dim):
    """Q, K, V: (B, S, H*D) with the 1/sqrt(D) scale already applied to Q."""
    B, S, HD = Q.shape
    H = HD // head_dim
    Qh = Q.reshape(B, S, H, head_dim)
    Kh = K.reshape(B, S, H, head_dim)
    Vh = V.reshape(B, S, H, head_dim)
    dot = jnp.einsum("bqhd,bkhd->bhqk", Qh, Kh)
    dot = dot - 1000000.0 * (1.0 - mask[:, None, None, :])
    attn = jax.nn.softmax(dot, axis=-1)
    out = jnp.einsum("bhqk,bkhd->bqhd", attn, Vh)
    return out.reshape(B, S, HD)


def _layer_norm(x, gamma, beta, eps=1e-5):
    mu = jnp.mean(x, axis=-1, keepdims=True)
    var = jnp.mean(jnp.square(x - mu), axis=-1, keepdims=True)
    return (x - mu) * jax.lax.rsqrt(var + eps) * gamma + beta


def init_block_params(key, hidden_dim, ff_dim, num_head, head_dim):
    def linear(k, fan_in, fan_out):
        kw, kb = jax.random.split(k)
        w = jax.random.normal(kw, (fan_in, fan_out), jnp.float32) / math.sqrt(fan_in)
        b = 0.02 * jax.random.normal(kb, (fan_out,), jnp.float32)
        return w, b

    ks = jax.random.split(key, 6)
    wq, bq = linear(ks[0], hidden_dim, num_head * head_dim)
    wk, bk = linear(ks[1], hidden_dim, num_head * head_dim)
    wv, bv = linear(ks[2], hidden_dim, num_head * head_dim)
    wo, bo = linear(ks[3], num_head * head_dim, hidden_dim)
    w1, b1 = linear(ks[4], hidden_dim, ff_dim)
    w2, b2 = linear(ks[5], ff_dim, hidden_dim)
    return dict(
        ln1_g=jnp.ones((hidden_dim,), jnp.float32),
        ln1_b=jnp.zeros((hidden_dim,), jnp.float32),
        ln2_g=jnp.ones((hidden_dim,), jnp.float32),
        ln2_b=jnp.zeros((hidden_dim,), jnp.float32),
        wq=wq, bq=bq, wk=wk, bk=bk, wv=wv, bv=bv, wo=wo, bo=bo,
        w1=w1, b1=b1, w2=w2, b2=b2)


def block_forward(params, X, mask, *, num_head, head_dim,
                  attn_impl="pallas", io_dtype=jnp.bfloat16,
                  matmul_dtype=jnp.bfloat16, exp_dtype=jnp.float32,
                  approx_recip=True, q_block=None, kv_block=None,
                  kv_buffering=None):
    """Forward pass of `Block` (dropout layers are inference-time identities)."""
    scale = 1.0 / math.sqrt(head_dim)

    # --- Attention sub-block ---
    h = _layer_norm(X, params["ln1_g"], params["ln1_b"])
    # Fold 1/sqrt(head_dim) into the Q projection (free in XLA) instead of
    # rescaling once per kv tile inside the kernel.
    Q = h @ (params["wq"] * scale) + params["bq"] * scale
    K = h @ params["wk"] + params["bk"]
    V = h @ params["wv"] + params["bv"]
    maskf = mask.astype(jnp.float32)

    # Q/K/V stay in their native (B, S, H*D) layout and the kernel emits a
    # lane-dense (B, S, H*D) slab, so there are no XLA-side head transposes
    # on either side of the attention kernel.
    if attn_impl == "pallas":
        attn = flash_softmax_attention(
            Q, K, V, maskf, head_dim=head_dim, io_dtype=io_dtype,
            matmul_dtype=matmul_dtype, exp_dtype=exp_dtype,
            approx_recip=approx_recip, q_block=q_block, kv_block=kv_block,
            kv_buffering=kv_buffering)
    else:
        attn = reference_softmax_attention(Q, K, V, maskf, head_dim)

    mha_out = attn.astype(jnp.float32) @ params["wo"] + params["bo"]
    res1 = X + mha_out                      # dropout1: identity at inference
    # TODO(synk): training-mode dropout (attention + residual/FFN) not wired in.

    # --- Feed-forward sub-block ---
    h2 = _layer_norm(res1, params["ln2_g"], params["ln2_b"])
    ff = jax.nn.gelu(h2 @ params["w1"] + params["b1"], approximate=False)
    ff = ff @ params["w2"] + params["b2"]
    return res1 + ff


# ---------------------------------------------------------------------------
# Demo / correctness checks
# ---------------------------------------------------------------------------

if __name__ == "__main__":
    # Small shapes consistent with the module:
    # batch=2, seq=16, hidden=32, num_head=2, head_dim=16, ff_dim=64.
    B, S = 2, 16
    hidden_dim, ff_dim = 32, 64
    num_head, head_dim = 2, 16

    root = jax.random.PRNGKey(0)
    kx, kp, kq = jax.random.split(root, 3)
    X = jax.random.normal(kx, (B, S, hidden_dim), dtype=jnp.float32)
    mask = jnp.ones((B, S), dtype=jnp.float32)
    # batch 1: one masked key in the first kv tile + a fully masked second kv
    # tile (at kv_block=8) -> exercises both the bias and the tile-skip paths.
    mask = mask.at[1, 3].set(0.0).at[1, 8:].set(0.0)
    params = init_block_params(kp, hidden_dim, ff_dim, num_head, head_dim)

    ref = block_forward(params, X, mask, num_head=num_head, head_dim=head_dim,
                        attn_impl="reference")
    ref = jax.block_until_ready(ref)

    # 1) Strict f32 path (exact semantics of the PyTorch module).
    out_f32 = block_forward(params, X, mask, num_head=num_head,
                            head_dim=head_dim, io_dtype=jnp.float32,
                            matmul_dtype=jnp.float32, approx_recip=False)
    out_f32 = jax.block_until_ready(out_f32)
    assert out_f32.shape == (B, S, hidden_dim)
    assert jnp.allclose(out_f32, ref, atol=1e-4, rtol=1e-4), "f32 path mismatch"

    # 2) Strict f32 with forced small tiles: multi-tile online softmax,
    #    masked-kv-tile skipping and multi-q-tile paths.
    out_tiled = block_forward(params, X, mask, num_head=num_head,
                              head_dim=head_dim, io_dtype=jnp.float32,
                              matmul_dtype=jnp.float32, approx_recip=False,
                              q_block=8, kv_block=8)
    out_tiled = jax.block_until_ready(out_tiled)
    assert jnp.allclose(out_tiled, ref, atol=1e-4, rtol=1e-4), "tiled path mismatch"

    # 3) Sequence-padding path: S not a multiple of the tile (attention only).
    S2 = 12
    kq1, kq2, kq3 = jax.random.split(kq, 3)
    Q2 = jax.random.normal(kq1, (B, S2, num_head * head_dim), jnp.float32) / 4.0
    K2 = jax.random.normal(kq2, (B, S2, num_head * head_dim), jnp.float32)
    V2 = jax.random.normal(kq3, (B, S2, num_head * head_dim), jnp.float32)
    mask2 = jnp.ones((B, S2), jnp.float32).at[0, 9:].set(0.0)
    ref2 = reference_softmax_attention(Q2, K2, V2, mask2, head_dim)
    out2 = flash_softmax_attention(Q2, K2, V2, mask2, head_dim=head_dim,
                                   io_dtype=jnp.float32,
                                   matmul_dtype=jnp.float32,
                                   approx_recip=False, q_block=8, kv_block=8)
    out2 = jax.block_until_ready(out2)
    assert out2.shape == ref2.shape
    assert jnp.allclose(out2, ref2, atol=1e-4, rtol=1e-4), "padded path mismatch"

    # 4) Perf defaults: bf16 Q/K/V/output I/O + bf16 MXU matmuls with f32
    #    softmax/accumulation and approximate reciprocal.  Loose tolerance —
    #    strict semantics are validated by the f32 paths above.
    out_perf = block_forward(params, X, mask, num_head=num_head,
                             head_dim=head_dim)
    out_perf = jax.block_until_ready(out_perf)
    assert jnp.allclose(out_perf, ref, atol=1e-1, rtol=5e-2), "bf16 path mismatch"

    print("KERNEL_OK")
</pallas_src>

<mosaic_0001>
module attributes {stable_mosaic.version = 11 : i64} {
  func.func @_flash_attn_kernel(%arg0: i32, %arg1: i32, %arg2: i32, %arg3: memref<2x1xi32, #tpu.memory_space<smem>>, %arg4: memref<1x1x16xf32, #tpu.memory_space<vmem>>, %arg5: memref<1x16x32xf32, #tpu.memory_space<vmem>>, %arg6: memref<1x16x32xf32, #tpu.memory_space<vmem>>, %arg7: memref<1x16x32xf32, #tpu.memory_space<vmem>>, %arg8: memref<1x16x32xf32, #tpu.memory_space<vmem>>, %arg9: memref<2x16x128xf32, #tpu.memory_space<vmem>>, %arg10: memref<2x16x128xf32, #tpu.memory_space<vmem>>, %arg11: memref<2x16x16xf32, #tpu.memory_space<vmem>>) attributes {dimension_semantics = [#tpu.dimension_semantics<parallel>, #tpu.dimension_semantics<parallel>, #tpu.dimension_semantics<arbitrary>], iteration_bounds = array<i64: 2, 1, 1>, scalar_prefetch = 1 : i64, scratch_operands = 3 : i64, tpu.core_type = #tpu.core_type<tc>, window_params = [{transform_indices = @transform_0, window_bounds = array<i64: 1, 1, 16>}, {transform_indices = @transform_1, window_bounds = array<i64: 1, 16, 32>}, {transform_indices = @transform_2, window_bounds = array<i64: 1, 16, 32>}, {transform_indices = @transform_3, window_bounds = array<i64: 1, 16, 32>}, {transform_indices = @transform_4, window_bounds = array<i64: 1, 16, 32>}]} {
    %c0_i32 = arith.constant 0 : i32
    %0 = arith.cmpi eq, %arg2, %c0_i32 : i32
    %1 = arith.extui %0 : i1 to i32
    %c0_i32_0 = arith.constant 0 : i32
    %2 = arith.cmpi ne, %1, %c0_i32_0 : i32
    scf.if %2 {
      %cst = arith.constant 0xFF800000 : f32
      %12 = vector.broadcast %cst : f32 to vector<2x16x128xf32>
      %c0 = arith.constant 0 : index
      %c0_5 = arith.constant 0 : index
      %c0_6 = arith.constant 0 : index
      %13 = vector.load %arg9[%c0, %c0_5, %c0_6] : memref<2x16x128xf32, #tpu.memory_space<vmem>>, vector<2x16x128xf32>
      tpu.vector_store %arg9[%c0, %c0_5, %c0_6], %12 {strides = array<i32>} : memref<2x16x128xf32, #tpu.memory_space<vmem>>, vector<2x16x128xf32>,
      %cst_7 = arith.constant 0.000000e+00 : f32
      %14 = vector.broadcast %cst_7 : f32 to vector<2x16x128xf32>
      %c0_8 = arith.constant 0 : index
      %c0_9 = arith.constant 0 : index
      %c0_10 = arith.constant 0 : index
      %15 = vector.load %arg10[%c0_8, %c0_9, %c0_10] : memref<2x16x128xf32, #tpu.memory_space<vmem>>, vector<2x16x128xf32>
      tpu.vector_store %arg10[%c0_8, %c0_9, %c0_10], %14 {strides = array<i32>} : memref<2x16x128xf32, #tpu.memory_space<vmem>>, vector<2x16x128xf32>,
      %cst_11 = arith.constant 0.000000e+00 : f32
      %16 = vector.broadcast %cst_11 : f32 to vector<2x16x16xf32>
      %c0_12 = arith.constant 0 : index
      %c0_13 = arith.constant 0 : index
      %c0_14 = arith.constant 0 : index
      %17 = vector.load %arg11[%c0_12, %c0_13, %c0_14] : memref<2x16x16xf32, #tpu.memory_space<vmem>>, vector<2x16x16xf32>
      tpu.vector_store %arg11[%c0_12, %c0_13, %c0_14], %16 {strides = array<i32>} : memref<2x16x16xf32, #tpu.memory_space<vmem>>, vector<2x16x16xf32>,
    } else {
    }
    %3 = arith.index_cast %arg0 : i32 to index
    %4 = arith.index_cast %arg2 : i32 to index
    %5 = memref.load %arg3[%3, %4] : memref<2x1xi32, #tpu.memory_space<smem>>
    %c0_i32_1 = arith.constant 0 : i32
    %6 = arith.cmpi sgt, %5, %c0_i32_1 : i32
    %7 = arith.extui %6 : i1 to i32
    %c0_i32_2 = arith.constant 0 : i32
    %8 = arith.cmpi ne, %7, %c0_i32_2 : i32
    scf.if %8 {
      %c0 = arith.constant 0 : index
      %12 = arith.index_cast %arg2 : i32 to index
      %c0_5 = arith.constant 0 : index
      %13 = vector.load %arg4[%c0, %12, %c0_5] : memref<1x1x16xf32, #tpu.memory_space<vmem>>, vector<1x1x16xf32>
      %14 = vector.shape_cast %13 : vector<1x1x16xf32> to vector<1x16xf32>
      %c0_6 = arith.constant 0 : index
      %c0_7 = arith.constant 0 : index
      %c0_8 = arith.constant 0 : index
      %15 = vector.load %arg5[%c0_6, %c0_7, %c0_8] : memref<1x16x32xf32, #tpu.memory_space<vmem>>, vector<1x16x16xf32>
      %16 = vector.shape_cast %15 : vector<1x16x16xf32> to vector<16x16xf32>
      %c0_9 = arith.constant 0 : index
      %c0_10 = arith.constant 0 : index
      %c0_11 = arith.constant 0 : index
      %17 = vector.load %arg6[%c0_9, %c0_10, %c0_11] : memref<1x16x32xf32, #tpu.memory_space<vmem>>, vector<1x16x16xf32>
      %18 = vector.shape_cast %17 : vector<1x16x16xf32> to vector<16x16xf32>
      %c0_12 = arith.constant 0 : index
      %c0_13 = arith.constant 0 : index
      %c0_14 = arith.constant 0 : index
      %19 = vector.load %arg7[%c0_12, %c0_13, %c0_14] : memref<1x16x32xf32, #tpu.memory_space<vmem>>, vector<1x16x16xf32>
      %20 = vector.shape_cast %19 : vector<1x16x16xf32> to vector<16x16xf32>
      %cst = arith.constant dense<0.000000e+00> : vector<16x16xf32>
      %21 = tpu.matmul %16, %18, %cst {dimension_numbers = #tpu.dot_dimension_numbers<[1], [1], [0], [0], [0, 0, 1, 0], [], []>} : vector<16x16xf32>, vector<16x16xf32>, vector<16x16xf32> -> vector<16x16xf32>
      %22 = vector.broadcast %14 : vector<1x16xf32> to vector<16x16xf32>
      %23 = arith.addf %21, %22 : vector<16x16xf32>
      %c0_15 = arith.constant 0 : index
      %c0_16 = arith.constant 0 : index
      %c0_17 = arith.constant 0 : index
      %24 = vector.load %arg9[%c0_15, %c0_16, %c0_17] : memref<2x16x128xf32, #tpu.memory_space<vmem>>, vector<1x16x128xf32>
      %25 = vector.shape_cast %24 : vector<1x16x128xf32> to vector<16x128xf32>
      %cst_18 = arith.constant dense<0xFF800000> : vector<16xf32>
      %26 = vector.multi_reduction <maximumf>, %23, %cst_18 [1] : vector<16x16xf32> to vector<16xf32>
      %27 = vector.shape_cast %26 : vector<16xf32> to vector<16x1xf32>
      %28 = vector.broadcast %27 : vector<16x1xf32> to vector<16x128xf32>
      %29 = arith.maximumf %25, %28 : vector<16x128xf32>
      %30 = arith.subf %25, %29 : vector<16x128xf32>
      %31 = math.exp %30 : vector<16x128xf32>
      %32 = vector.extract_strided_slice %29 {offsets = [0, 0], sizes = [16, 1], strides = [1, 1]} : vector<16x128xf32> to vector<16x1xf32>
      %33 = vector.broadcast %32 : vector<16x1xf32> to vector<16x16xf32>
      %34 = arith.subf %23, %33 : vector<16x16xf32>
      %35 = math.exp %34 : vector<16x16xf32>
      %c0_19 = arith.constant 0 : index
      %c0_20 = arith.constant 0 : index
      %c0_21 = arith.constant 0 : index
      %36 = vector.load %arg10[%c0_19, %c0_20, %c0_21] : memref<2x16x128xf32, #tpu.memory_space<vmem>>, vector<1x16x128xf32>
      %37 = vector.shape_cast %36 : vector<1x16x128xf32> to vector<16x128xf32>
      %38 = arith.mulf %31, %37 : vector<16x128xf32>
      %cst_22 = arith.constant dense<0.000000e+00> : vector<16xf32>
      %39 = vector.multi_reduction <add>, %35, %cst_22 [1] : vector<16x16xf32> to vector<16xf32>
      %40 = vector.shape_cast %39 : vector<16xf32> to vector<16x1xf32>
      %41 = vector.broadcast %40 : vector<16x1xf32> to vector<16x128xf32>
      %42 = arith.addf %38, %41 : vector<16x128xf32>
      %c0_23 = arith.constant 0 : index
      %c0_24 = arith.constant 0 : index
      %c0_25 = arith.constant 0 : index
      %43 = vector.load %arg10[%c0_23, %c0_24, %c0_25] : memref<2x16x128xf32, #tpu.memory_space<vmem>>, vector<1x16x128xf32>
      %44 = vector.shape_cast %43 : vector<1x16x128xf32> to vector<16x128xf32>
      %45 = vector.shape_cast %42 : vector<16x128xf32> to vector<1x16x128xf32>
      tpu.vector_store %arg10[%c0_23, %c0_24, %c0_25], %45 {strides = array<i32>} : memref<2x16x128xf32, #tpu.memory_space<vmem>>, vector<1x16x128xf32>,
      %46 = vector.extract_strided_slice %31 {offsets = [0, 0], sizes = [16, 1], strides = [1, 1]} : vector<16x128xf32> to vector<16x1xf32>
      %c0_26 = arith.constant 0 : index
      %c0_27 = arith.constant 0 : index
      %c0_28 = arith.constant 0 : index
      %47 = vector.load %arg11[%c0_26, %c0_27, %c0_28] : memref<2x16x16xf32, #tpu.memory_space<vmem>>, vector<1x16x16xf32>
      %48 = vector.shape_cast %47 : vector<1x16x16xf32> to vector<16x16xf32>
      %49 = vector.broadcast %46 : vector<16x1xf32> to vector<16x16xf32>
      %50 = arith.mulf %49, %48 : vector<16x16xf32>
      %cst_29 = arith.constant dense<0.000000e+00> : vector<16x16xf32>
      %51 = tpu.matmul %35, %20, %cst_29 {dimension_numbers = #tpu.dot_dimension_numbers<[1], [0], [0], [1], [0, 0, 1, 1], [], []>} : vector<16x16xf32>, vector<16x16xf32>, vector<16x16xf32> -> vector<16x16xf32>
      %52 = arith.addf %50, %51 : vector<16x16xf32>
      %c0_30 = arith.constant 0 : index
      %c0_31 = arith.constant 0 : index
      %c0_32 = arith.constant 0 : index
      %53 = vector.load %arg11[%c0_30, %c0_31, %c0_32] : memref<2x16x16xf32, #tpu.memory_space<vmem>>, vector<1x16x16xf32>
      %54 = vector.shape_cast %53 : vector<1x16x16xf32> to vector<16x16xf32>
      %55 = vector.shape_cast %52 : vector<16x16xf32> to vector<1x16x16xf32>
      tpu.vector_store %arg11[%c0_30, %c0_31, %c0_32], %55 {strides = array<i32>} : memref<2x16x16xf32, #tpu.memory_space<vmem>>, vector<1x16x16xf32>,
      %c0_33 = arith.constant 0 : index
      %c0_34 = arith.constant 0 : index
      %c0_35 = arith.constant 0 : index
      %56 = vector.load %arg9[%c0_33, %c0_34, %c0_35] : memref<2x16x128xf32, #tpu.memory_space<vmem>>, vector<1x16x128xf32>
      %57 = vector.shape_cast %56 : vector<1x16x128xf32> to vector<16x128xf32>
      %58 = vector.shape_cast %29 : vector<16x128xf32> to vector<1x16x128xf32>
      tpu.vector_store %arg9[%c0_33, %c0_34, %c0_35], %58 {strides = array<i32>} : memref<2x16x128xf32, #tpu.memory_space<vmem>>, vector<1x16x128xf32>,
      %c0_36 = arith.constant 0 : index
      %c0_37 = arith.constant 0 : index
      %c16 = arith.constant 16 : index
      %59 = vector.load %arg5[%c0_36, %c0_37, %c16] : memref<1x16x32xf32, #tpu.memory_space<vmem>>, vector<1x16x16xf32>
      %60 = vector.shape_cast %59 : vector<1x16x16xf32> to vector<16x16xf32>
      %c0_38 = arith.constant 0 : index
      %c0_39 = arith.constant 0 : index
      %c16_40 = arith.constant 16 : index
      %61 = vector.load %arg6[%c0_38, %c0_39, %c16_40] : memref<1x16x32xf32, #tpu.memory_space<vmem>>, vector<1x16x16xf32>
      %62 = vector.shape_cast %61 : vector<1x16x16xf32> to vector<16x16xf32>
      %c0_41 = arith.constant 0 : index
      %c0_42 = arith.constant 0 : index
      %c16_43 = arith.constant 16 : index
      %63 = vector.load %arg7[%c0_41, %c0_42, %c16_43] : memref<1x16x32xf32, #tpu.memory_space<vmem>>, vector<1x16x16xf32>
      %64 = vector.shape_cast %63 : vector<1x16x16xf32> to vector<16x16xf32>
      %cst_44 = arith.constant dense<0.000000e+00> : vector<16x16xf32>
      %65 = tpu.matmul %60, %62, %cst_44 {dimension_numbers = #tpu.dot_dimension_numbers<[1], [1], [0], [0], [0, 0, 1, 0], [], []>} : vector<16x16xf32>, vector<16x16xf32>, vector<16x16xf32> -> vector<16x16xf32>
      %66 = vector.broadcast %14 : vector<1x16xf32> to vector<16x16xf32>
      %67 = arith.addf %65, %66 : vector<16x16xf32>
      %c1 = arith.constant 1 : index
      %c0_45 = arith.constant 0 : index
      %c0_46 = arith.constant 0 : index
      %68 = vector.load %arg9[%c1, %c0_45, %c0_46] : memref<2x16x128xf32, #tpu.memory_space<vmem>>, vector<1x16x128xf32>
      %69 = vector.shape_cast %68 : vector<1x16x128xf32> to vector<16x128xf32>
      %cst_47 = arith.constant dense<0xFF800000> : vector<16xf32>
      %70 = vector.multi_reduction <maximumf>, %67, %cst_47 [1] : vector<16x16xf32> to vector<16xf32>
      %71 = vector.shape_cast %70 : vector<16xf32> to vector<16x1xf32>
      %72 = vector.broadcast %71 : vector<16x1xf32> to vector<16x128xf32>
      %73 = arith.maximumf %69, %72 : vector<16x128xf32>
      %74 = arith.subf %69, %73 : vector<16x128xf32>
      %75 = math.exp %74 : vector<16x128xf32>
      %76 = vector.extract_strided_slice %73 {offsets = [0, 0], sizes = [16, 1], strides = [1, 1]} : vector<16x128xf32> to vector<16x1xf32>
      %77 = vector.broadcast %76 : vector<16x1xf32> to vector<16x16xf32>
      %78 = arith.subf %67, %77 : vector<16x16xf32>
      %79 = math.exp %78 : vector<16x16xf32>
      %c1_48 = arith.constant 1 : index
      %c0_49 = arith.constant 0 : index
      %c0_50 = arith.constant 0 : index
      %80 = vector.load %arg10[%c1_48, %c0_49, %c0_50] : memref<2x16x128xf32, #tpu.memory_space<vmem>>, vector<1x16x128xf32>
      %81 = vector.shape_cast %80 : vector<1x16x128xf32> to vector<16x128xf32>
      %82 = arith.mulf %75, %81 : vector<16x128xf32>
      %cst_51 = arith.constant dense<0.000000e+00> : vector<16xf32>
      %83 = vector.multi_reduction <add>, %79, %cst_51 [1] : vector<16x16xf32> to vector<16xf32>
      %84 = vector.shape_cast %83 : vector<16xf32> to vector<16x1xf32>
      %85 = vector.broadcast %84 : vector<16x1xf32> to vector<16x128xf32>
      %86 = arith.addf %82, %85 : vector<16x128xf32>
      %c1_52 = arith.constant 1 : index
      %c0_53 = arith.constant 0 : index
      %c0_54 = arith.constant 0 : index
      %87 = vector.load %arg10[%c1_52, %c0_53, %c0_54] : memref<2x16x128xf32, #tpu.memory_space<vmem>>, vector<1x16x128xf32>
      %88 = vector.shape_cast %87 : vector<1x16x128xf32> to vector<16x128xf32>
      %89 = vector.shape_cast %86 : vector<16x128xf32> to vector<1x16x128xf32>
      tpu.vector_store %arg10[%c1_52, %c0_53, %c0_54], %89 {strides = array<i32>} : memref<2x16x128xf32, #tpu.memory_space<vmem>>, vector<1x16x128xf32>,
      %90 = vector.extract_strided_slice %75 {offsets = [0, 0], sizes = [16, 1], strides = [1, 1]} : vector<16x128xf32> to vector<16x1xf32>
      %c1_55 = arith.constant 1 : index
      %c0_56 = arith.constant 0 : index
      %c0_57 = arith.constant 0 : index
      %91 = vector.load %arg11[%c1_55, %c0_56, %c0_57] : memref<2x16x16xf32, #tpu.memory_space<vmem>>, vector<1x16x16xf32>
      %92 = vector.shape_cast %91 : vector<1x16x16xf32> to vector<16x16xf32>
      %93 = vector.broadcast %90 : vector<16x1xf32> to vector<16x16xf32>
      %94 = arith.mulf %93, %92 : vector<16x16xf32>
      %cst_58 = arith.constant dense<0.000000e+00> : vector<16x16xf32>
      %95 = tpu.matmul %79, %64, %cst_58 {dimension_numbers = #tpu.dot_dimension_numbers<[1], [0], [0], [1], [0, 0, 1, 1], [], []>} : vector<16x16xf32>, vector<16x16xf32>, vector<16x16xf32> -> vector<16x16xf32>
      %96 = arith.addf %94, %95 : vector<16x16xf32>
      %c1_59 = arith.constant 1 : index
      %c0_60 = arith.constant 0 : index
      %c0_61 = arith.constant 0 : index
      %97 = vector.load %arg11[%c1_59, %c0_60, %c0_61] : memref<2x16x16xf32, #tpu.memory_space<vmem>>, vector<1x16x16xf32>
      %98 = vector.shape_cast %97 : vector<1x16x16xf32> to vector<16x16xf32>
      %99 = vector.shape_cast %96 : vector<16x16xf32> to vector<1x16x16xf32>
      tpu.vector_store %arg11[%c1_59, %c0_60, %c0_61], %99 {strides = array<i32>} : memref<2x16x16xf32, #tpu.memory_space<vmem>>, vector<1x16x16xf32>,
      %c1_62 = arith.constant 1 : index
      %c0_63 = arith.constant 0 : index
      %c0_64 = arith.constant 0 : index
      %100 = vector.load %arg9[%c1_62, %c0_63, %c0_64] : memref<2x16x128xf32, #tpu.memory_space<vmem>>, vector<1x16x128xf32>
      %101 = vector.shape_cast %100 : vector<1x16x128xf32> to vector<16x128xf32>
      %102 = vector.shape_cast %73 : vector<16x128xf32> to vector<1x16x128xf32>
      tpu.vector_store %arg9[%c1_62, %c0_63, %c0_64], %102 {strides = array<i32>} : memref<2x16x128xf32, #tpu.memory_space<vmem>>, vector<1x16x128xf32>,
    } else {
    }
    %c0_i32_3 = arith.constant 0 : i32
    %9 = arith.cmpi eq, %arg2, %c0_i32_3 : i32
    %10 = arith.extui %9 : i1 to i32
    %c0_i32_4 = arith.constant 0 : i32
    %11 = arith.cmpi ne, %10, %c0_i32_4 : i32
    scf.if %11 {
      %c0 = arith.constant 0 : index
      %c0_5 = arith.constant 0 : index
      %c0_6 = arith.constant 0 : index
      %12 = vector.load %arg10[%c0, %c0_5, %c0_6] : memref<2x16x128xf32, #tpu.memory_space<vmem>>, vector<1x16x128xf32>
      %13 = vector.shape_cast %12 : vector<1x16x128xf32> to vector<16x128xf32>
      %14 = vector.extract_strided_slice %13 {offsets = [0, 0], sizes = [16, 1], strides = [1, 1]} : vector<16x128xf32> to vector<16x1xf32>
      %15 = tpu.reciprocal %14 : vector<16x1xf32> -> vector<16x1xf32>
      %c0_7 = arith.constant 0 : index
      %c0_8 = arith.constant 0 : index
      %c0_9 = arith.constant 0 : index
      %16 = vector.load %arg11[%c0_7, %c0_8, %c0_9] : memref<2x16x16xf32, #tpu.memory_space<vmem>>, vector<1x16x16xf32>
      %17 = vector.shape_cast %16 : vector<1x16x16xf32> to vector<16x16xf32>
      %18 = vector.broadcast %15 : vector<16x1xf32> to vector<16x16xf32>
      %19 = arith.mulf %17, %18 : vector<16x16xf32>
      %c1 = arith.constant 1 : index
      %c0_10 = arith.constant 0 : index
      %c0_11 = arith.constant 0 : index
      %20 = vector.load %arg10[%c1, %c0_10, %c0_11] : memref<2x16x128xf32, #tpu.memory_space<vmem>>, vector<1x16x128xf32>
      %21 = vector.shape_cast %20 : vector<1x16x128xf32> to vector<16x128xf32>
      %22 = vector.extract_strided_slice %21 {offsets = [0, 0], sizes = [16, 1], strides = [1, 1]} : vector<16x128xf32> to vector<16x1xf32>
      %23 = tpu.reciprocal %22 : vector<16x1xf32> -> vector<16x1xf32>
      %c1_12 = arith.constant 1 : index
      %c0_13 = arith.constant 0 : index
      %c0_14 = arith.constant 0 : index
      %24 = vector.load %arg11[%c1_12, %c0_13, %c0_14] : memref<2x16x16xf32, #tpu.memory_space<vmem>>, vector<1x16x16xf32>
      %25 = vector.shape_cast %24 : vector<1x16x16xf32> to vector<16x16xf32>
      %26 = vector.broadcast %23 : vector<16x1xf32> to vector<16x16xf32>
      %27 = arith.mulf %25, %26 : vector<16x16xf32>
      %28 = tpu.concatenate %19, %27 in 1 : vector<16x16xf32>, vector<16x16xf32> -> vector<16x32xf32>
      %c0_15 = arith.constant 0 : index
      %c0_16 = arith.constant 0 : index
      %c0_17 = arith.constant 0 : index
      %29 = vector.load %arg8[%c0_15, %c0_16, %c0_17] : memref<1x16x32xf32, #tpu.memory_space<vmem>>, vector<1x16x32xf32>
      %30 = vector.shape_cast %29 : vector<1x16x32xf32> to vector<16x32xf32>
      %31 = vector.shape_cast %28 : vector<16x32xf32> to vector<1x16x32xf32>
      tpu.vector_store %arg8[%c0_15, %c0_16, %c0_17], %31 {strides = array<i32>} : memref<1x16x32xf32, #tpu.memory_space<vmem>>, vector<1x16x32xf32>,
    } else {
    }
    return
  }
  func.func @transform_0(%arg0: i32, %arg1: i32, %arg2: i32, %arg3: memref<2x1xi32, #tpu.memory_space<smem>>) -> (i32, i32, i32) {
    %c0_i32 = arith.constant 0 : i32
    %c0_i32_0 = arith.constant 0 : i32
    %c0_i32_1 = arith.constant 0 : i32
    return %arg0, %c0_i32, %c0_i32_0 : i32, i32, i32
  }
  func.func @transform_1(%arg0: i32, %arg1: i32, %arg2: i32, %arg3: memref<2x1xi32, #tpu.memory_space<smem>>) -> (i32, i32, i32) {
    %c0_i32 = arith.constant 0 : i32
    %c0_i32_0 = arith.constant 0 : i32
    return %arg0, %arg1, %c0_i32 : i32, i32, i32
  }
  func.func @transform_2(%arg0: i32, %arg1: i32, %arg2: i32, %arg3: memref<2x1xi32, #tpu.memory_space<smem>>) -> (i32, i32, i32) {
    %c0_i32 = arith.constant 0 : i32
    %c0_i32_0 = arith.constant 0 : i32
    return %arg0, %arg2, %c0_i32 : i32, i32, i32
  }
  func.func @transform_3(%arg0: i32, %arg1: i32, %arg2: i32, %arg3: memref<2x1xi32, #tpu.memory_space<smem>>) -> (i32, i32, i32) {
    %c0_i32 = arith.constant 0 : i32
    %c0_i32_0 = arith.constant 0 : i32
    return %arg0, %arg2, %c0_i32 : i32, i32, i32
  }
  func.func @transform_4(%arg0: i32, %arg1: i32, %arg2: i32, %arg3: memref<2x1xi32, #tpu.memory_space<smem>>) -> (i32, i32, i32) {
    %c0_i32 = arith.constant 0 : i32
    %c0_i32_0 = arith.constant 0 : i32
    return %arg0, %arg1, %c0_i32 : i32, i32, i32
  }
}

</mosaic_0001>

<llo_original>
// kernel: tpu_custom_call.1
$region0: #{tpu_custom_call.1}
  #allocation0 [shape = 'u32[]', space=smem, size = 0x4, offset = 0x4, fixed_abs, tag = 'smem constant byte address 0x4 - core index']
  #allocation1 [shape = 'u32[144,128]{1,0:T(1,128)}', space=vmem, size = 0x12000, scoped, tag = 'internal scratch']
  #allocation2 [shape = 'f32[2,16,128]{2,1,0:T(8,128)}', space=vmem, size = 0x4000, scoped, tag = 'scratch operand']
  #allocation3 [shape = 'f32[2,16,128]{2,1,0:T(8,128)}', space=vmem, size = 0x4000, scoped, tag = 'scratch operand']
  #allocation4 [shape = 'f32[2,16,16]{2,1,0:T(8,128)}', space=vmem, size = 0x4000, scoped, tag = 'scratch operand']
  #allocation5 [shape = 's32[1]{0}', space=sflag, size = 0x4, scoped, tag = 'scoped memory for tpu_custom_call.1']
  #allocation6 [shape = 'u8[1024]{0}', space=smem, size = 0x400, scoped, tag = 'prefetched SMEM operand 0']
  %s0 = inlined_call_operand.vmem [shape: s32[2,1], index: 0, kind: input, shape index: {}]
  %s1 = inlined_call_operand.vmem [shape: f32[2,1,16], index: 1, kind: input, shape index: {}]
  %s2 = inlined_call_operand.hbm [shape: f32[2,16,32], index: 2, kind: input, shape index: {}]
  %s3 = inlined_call_operand.hbm [shape: f32[2,16,32], index: 3, kind: input, shape index: {}]
  %s4 = inlined_call_operand.hbm [shape: f32[2,16,32], index: 4, kind: input, shape index: {}]
  %s5 = inlined_call_operand.hbm [shape: f32[2,16,32], index: 5, kind: output, shape index: {}]
  %s6 = sld [smem:[#allocation0]]
  $region73: #{tpu_custom_call.1} parent=0
    _
  %s8 = ssub.s32 1, %s6
  %s9 = scalar_select 0, %s8, %s6
  %s10 = sshll.u32 %s0, 4
  %s11 = int_to_ptr.vmem [resolvable:$true] %s10
  %13 = dma.vmem_to_smem %s11, 32, [#allocation6], [#allocation5]
  %14 = dma.done [#allocation5], 32
  %15 = sfence
  $region1: #{tpu_custom_call.1} parent=0
    #allocation7 [shape = 'u8[16384]{0}', space=vmem, size = 0x4000, scoped, tag = 'input window, operand 2']
    #allocation8 [shape = 's32[2]{0}', space=sflag, size = 0x8, scoped, tag = 'scoped memory for tpu_custom_call.1']
    #allocation9 [shape = 's32[2]{0}', space=sflag, size = 0x8, scoped, tag = 'scoped memory for tpu_custom_call.1']
    #allocation10 [shape = 'u8[16384]{0}', space=vmem, size = 0x4000, scoped, tag = 'input window, operand 3']
    #allocation11 [shape = 's32[2]{0}', space=sflag, size = 0x8, scoped, tag = 'scoped memory for tpu_custom_call.1']
    #allocation12 [shape = 'u8[16384]{0}', space=vmem, size = 0x4000, scoped, tag = 'input window, operand 4']
    #allocation13 [shape = 'u8[16384]{0}', space=vmem, size = 0x4000, scoped, tag = 'output window, operand 0']
    %16 = vsyncpa [#allocation8], 0
    %s17 = scalar_lea.sflag [#allocation8], 1
    %18 = vsyncpa %s17, 0
    %19 = vsyncpa [#allocation11], 0
    %s20 = scalar_lea.sflag [#allocation11], 1
    %21 = vsyncpa %s20, 0
    %22 = vsyncpa [#allocation9], 0
    %s23 = scalar_lea.sflag [#allocation9], 1
    %24 = vsyncpa %s23, 0
    loop: start=0, step=1, limit=4
    $region2: #{tpu_custom_call.1} parent=1 // loop_pre_header
      _
    $region3: #{tpu_custom_call.1} parent=1 // loop_header
      %s26 = sphi 0, %s30
      %p27 = scmp.ge.s32.totalorder %s26, 4
      %s33 = sphi 0, %s52
      %s34 = sphi 0, %s48
      %s35 = sphi 0, %s44
      %s36 = sphi 0, %s33
      %s37 = sphi 0, %s34
      %s38 = sphi 0, %s35
      %s39 = sphi 0, %s36
      %s40 = sphi 0, %s37
      %s41 = sphi 0, %s38
      %s55 = sphi 0, %s57
      %s58 = sphi 0, %s55
      %s59 = sphi 0, %s58
      %s75 = sphi 0, %s59
      %s83 = sphi 0, %s85
      %s86 = sphi 0, %s83
      %s87 = sphi 0, %s86
      %s103 = sphi 0, %s87
      %s111 = sphi 0, %s113
      %s114 = sphi 0, %s111
      %s115 = sphi 0, %s114
      %s131 = sphi 0, %s115
      %s139 = sphi 0, %s141
      %s142 = sphi 0, %s139
      %s143 = sphi 0, %s142
      %s159 = sphi 0, %s143
      %s167 = sphi 0, %s169
      %s170 = sphi 0, %s167
      %s171 = sphi 0, %s170
      %s187 = sphi 0, %s171
    $region4: #{tpu_custom_call.1} parent=1 // loop_header_branch
      %29 = sbr.rel (%p27) target = $region8
    $region5: #{tpu_custom_call.1} parent=1 // loop_body
      %s31 = ssub.s32 %s26, 1
      %s32 = ssub.s32 %s26, 2
      %s42 = sadd.s32 1, %s35
      %p43 = scmp.ge.s32.totalorder %s42, 1
      %s44 = scalar_select %p43, 0, %s42
      %s45 = sadd.s32 1, %s34
      %s46 = scalar_select %p43, %s45, %s34
      %p47 = scmp.ge.s32.totalorder %s46, 1
      %s48 = scalar_select %p47, 0, %s46
      %s49 = sadd.s32 1, %s33
      %s50 = scalar_select %p47, %s49, %s33
      %p51 = scmp.ge.s32.totalorder %s50, 2
      %s52 = scalar_select %p51, 0, %s50
      %s53 = ssub.s32 %s33, %s52
      %p54 = scmp.eq.s32.totalorder %s53, 0
      %s56 = sadd.s32 %s55, 1
      %s57 = scalar_select %p54, %s55, %s56
      %p60 = pneg %p54
      %p61 = scmp.eq.s32.totalorder %s26, 1
      %p62 = por %p60, %p61
      %p63 = scmp.ne.s32.totalorder %s55, %s58
      %p64 = scmp.eq.s32.totalorder %s26, 0
      %p65 = por %p63, %p64
      %p66 = scmp.ne.s32.totalorder %s55, %s58
      %p67 = scmp.eq.s32.totalorder %s31, 1
      %p68 = por %p66, %p67
      %p69 = scmp.ne.s32.totalorder %s58, %s59
      %p70 = scmp.eq.s32.totalorder %s31, 0
      %p71 = por %p69, %p70
      %p72 = scmp.ne.s32.totalorder %s58, %s59
      %p73 = scmp.eq.s32.totalorder %s32, 1
      %p74 = por %p72, %p73
      %p76 = scmp.ne.s32.totalorder %s59, %s75
      %p77 = scmp.eq.s32.totalorder %s32, 0
      %p78 = por %p76, %p77
      %s79 = ssub.s32 %s33, %s52
      %s80 = ssub.s32 %s34, %s48
      %s81 = sor.u32 %s79, %s80
      %p82 = scmp.eq.s32.totalorder %s81, 0
      %s84 = sadd.s32 %s83, 1
      %s85 = scalar_select %p82, %s83, %s84
      %p88 = pneg %p82
      %p89 = scmp.eq.s32.totalorder %s26, 1
      %p90 = por %p88, %p89
      %p91 = scmp.ne.s32.totalorder %s83, %s86
      %p92 = scmp.eq.s32.totalorder %s26, 0
      %p93 = por %p91, %p92
      %p94 = scmp.ne.s32.totalorder %s83, %s86
      %p95 = scmp.eq.s32.totalorder %s31, 1
      %p96 = por %p94, %p95
      %p97 = scmp.ne.s32.totalorder %s86, %s87
      %p98 = scmp.eq.s32.totalorder %s31, 0
      %p99 = por %p97, %p98
      %p100 = scmp.ne.s32.totalorder %s86, %s87
      %p101 = scmp.eq.s32.totalorder %s32, 1
      %p102 = por %p100, %p101
      %p104 = scmp.ne.s32.totalorder %s87, %s103
      %p105 = scmp.eq.s32.totalorder %s32, 0
      %p106 = por %p104, %p105
      %s107 = ssub.s32 %s33, %s52
      %s108 = ssub.s32 %s35, %s44
      %s109 = sor.u32 %s107, %s108
      %p110 = scmp.eq.s32.totalorder %s109, 0
      %s112 = sadd.s32 %s111, 1
      %s113 = scalar_select %p110, %s111, %s112
      %p116 = pneg %p110
      %p117 = scmp.eq.s32.totalorder %s26, 1
      %p118 = por %p116, %p117
      %p119 = scmp.ne.s32.totalorder %s111, %s114
      %p120 = scmp.eq.s32.totalorder %s26, 0
      %p121 = por %p119, %p120
      %p122 = scmp.ne.s32.totalorder %s111, %s114
      %p123 = scmp.eq.s32.totalorder %s31, 1
      %p124 = por %p122, %p123
      %p125 = scmp.ne.s32.totalorder %s114, %s115
      %p126 = scmp.eq.s32.totalorder %s31, 0
      %p127 = por %p125, %p126
      %p128 = scmp.ne.s32.totalorder %s114, %s115
      %p129 = scmp.eq.s32.totalorder %s32, 1
      %p130 = por %p128, %p129
      %p132 = scmp.ne.s32.totalorder %s115, %s131
      %p133 = scmp.eq.s32.totalorder %s32, 0
      %p134 = por %p132, %p133
      %s135 = ssub.s32 %s33, %s52
      %s136 = ssub.s32 %s35, %s44
      %s137 = sor.u32 %s135, %s136
      %p138 = scmp.eq.s32.totalorder %s137, 0
      %s140 = sadd.s32 %s139, 1
      %s141 = scalar_select %p138, %s139, %s140
      %p144 = pneg %p138
      %p145 = scmp.eq.s32.totalorder %s26, 1
      %p146 = por %p144, %p145
      %p147 = scmp.ne.s32.totalorder %s139, %s142
      %p148 = scmp.eq.s32.totalorder %s26, 0
      %p149 = por %p147, %p148
      %p150 = scmp.ne.s32.totalorder %s139, %s142
      %p151 = scmp.eq.s32.totalorder %s31, 1
      %p152 = por %p150, %p151
      %p153 = scmp.ne.s32.totalorder %s142, %s143
      %p154 = scmp.eq.s32.totalorder %s31, 0
      %p155 = por %p153, %p154
      %p156 = scmp.ne.s32.totalorder %s142, %s143
      %p157 = scmp.eq.s32.totalorder %s32, 1
      %p158 = por %p156, %p157
      %p160 = scmp.ne.s32.totalorder %s143, %s159
      %p161 = scmp.eq.s32.totalorder %s32, 0
      %p162 = por %p160, %p161
      %s163 = ssub.s32 %s33, %s52
      %s164 = ssub.s32 %s34, %s48
      %s165 = sor.u32 %s163, %s164
      %p166 = scmp.eq.s32.totalorder %s165, 0
      %s168 = sadd.s32 %s167, 1
      %s169 = scalar_select %p166, %s167, %s168
      %p172 = pneg %p166
      %p173 = scmp.eq.s32.totalorder %s26, 1
      %p174 = por %p172, %p173
      %p175 = scmp.ne.s32.totalorder %s167, %s170
      %p176 = scmp.eq.s32.totalorder %s26, 0
      %p177 = por %p175, %p176
      %p178 = scmp.ne.s32.totalorder %s167, %s170
      %p179 = scmp.eq.s32.totalorder %s31, 1
      %p180 = por %p178, %p179
      %p181 = scmp.ne.s32.totalorder %s170, %s171
      %p182 = scmp.eq.s32.totalorder %s31, 0
      %p183 = por %p181, %p182
      %p184 = scmp.ne.s32.totalorder %s170, %s171
      %p185 = scmp.eq.s32.totalorder %s32, 1
      %p186 = por %p184, %p185
      %p188 = scmp.ne.s32.totalorder %s171, %s187
      %p189 = scmp.eq.s32.totalorder %s32, 0
      %p190 = por %p188, %p189
      %p191 = scmp.le.s32.totalorder 1, %s26
      %p192 = scmp.lt.s32.totalorder %s26, 3
      %p193 = pnand %p191, %p192
      %p194 = pneg %p193
      // Predicated region
      $region9: #{tpu_custom_call.1} parent=5 // pred_check
        _
      $region10: #{tpu_custom_call.1} parent=5 // pred_check_branch
        %196 = sbr.rel (%p193) target = $region12
      $region11: #{tpu_custom_call.1} parent=5 // pred_region
        %s197 = ssub.s32 %s26, 1
      $region12: #{tpu_custom_call.1} parent=5 // pred_fallthru
        _
      %p198 = scmp.lt.s32.totalorder %s26, 2
      // Predicated region
      $region13: #{tpu_custom_call.1} parent=5 // pred_check
        %p199 = pneg %p198
      $region14: #{tpu_custom_call.1} parent=5 // pred_check_branch
        %201 = sbr.rel (%p199) target = $region16
      $region15: #{tpu_custom_call.1} parent=5 // pred_region
        // Predicated region
        $region17: #{tpu_custom_call.1} parent=15 // pred_check
          %p202 = pneg %p65
        $region18: #{tpu_custom_call.1} parent=15 // pred_check_branch
          %204 = sbr.rel (%p202) target = $region20
        $region19: #{tpu_custom_call.1} parent=15 // pred_region
          %p205 = scmp.lt.s32.totalorder %s33, 1
          %s206 = scalar_select %p205, %s33, 1
          %s207 = scalar_lea.vmem %s1, %s206
        $region20: #{tpu_custom_call.1} parent=15 // pred_fallthru
          _
        // Predicated region
        $region21: #{tpu_custom_call.1} parent=15 // pred_check
          %p208 = pneg %p93
        $region22: #{tpu_custom_call.1} parent=15 // pred_check_branch
          %210 = sbr.rel (%p208) target = $region24
        $region23: #{tpu_custom_call.1} parent=15 // pred_region
          %s211 = sand.u32 %s83, 1
          %s212 = scalar_lea.sflag [#allocation8], %s211
          %s213 = sand.u32 %s83, 1
          %s214 = smul.addr %s213, 16
          %s215 = scalar_lea.vmem [#allocation7], %s214
          %s216 = smul.u32 2, %s34
          %s218 = ssub.s32 256, 256
          %219 = vsyncadd %s212, %s218
          %s220 = smul.addr %s33, 2
          %s221 = sadd.s32 %s216, %s220
          %s222 = smul.addr %s221, 128
          %s223 = scalar_lea.hbm %s2, %s222
          %s224 = sshll.u32 %s215, 4
          %s225 = int_to_ptr.vmem [resolvable:$true] %s224
          %230 = dma.hbm_to_vmem [thread:$0]  %s223, 256, %s225, %s212, 128, 128, 8
        $region24: #{tpu_custom_call.1} parent=15 // pred_fallthru
          _
        // Predicated region
        $region25: #{tpu_custom_call.1} parent=15 // pred_check
          %p231 = pneg %p121
        $region26: #{tpu_custom_call.1} parent=15 // pred_check_branch
          %233 = sbr.rel (%p231) target = $region28
        $region27: #{tpu_custom_call.1} parent=15 // pred_region
          %s234 = sand.u32 %s26, 1
          %s235 = scalar_lea.sflag [#allocation11], %s234
          %s236 = sand.u32 %s111, 1
          %s237 = smul.addr %s236, 16
          %s238 = scalar_lea.vmem [#allocation10], %s237
          %s239 = smul.u32 2, %s35
          %s241 = ssub.s32 256, 256
          %242 = vsyncadd %s235, %s241
          %s243 = smul.addr %s33, 2
          %s244 = sadd.s32 %s239, %s243
          %s245 = smul.addr %s244, 128
          %s246 = scalar_lea.hbm %s3, %s245
          %s247 = sshll.u32 %s238, 4
          %s248 = int_to_ptr.vmem [resolvable:$true] %s247
          %253 = dma.hbm_to_vmem [thread:$0]  %s246, 256, %s248, %s235, 128, 128, 8
        $region28: #{tpu_custom_call.1} parent=15 // pred_fallthru
          _
        // Predicated region
        $region29: #{tpu_custom_call.1} parent=15 // pred_check
          %p254 = pneg %p149
        $region30: #{tpu_custom_call.1} parent=15 // pred_check_branch
          %256 = sbr.rel (%p254) target = $region32
        $region31: #{tpu_custom_call.1} parent=15 // pred_region
          %s257 = sand.u32 %s26, 1
          %s258 = scalar_lea.sflag [#allocation11], %s257
          %s259 = sand.u32 %s139, 1
          %s260 = smul.addr %s259, 16
          %s261 = scalar_lea.vmem [#allocation12], %s260
          %s262 = smul.u32 2, %s35
          %s264 = ssub.s32 256, 256
          %265 = vsyncadd %s258, %s264
          %s266 = smul.addr %s33, 2
          %s267 = sadd.s32 %s262, %s266
          %s268 = smul.addr %s267, 128
          %s269 = scalar_lea.hbm %s4, %s268
          %s270 = sshll.u32 %s261, 4
          %s271 = int_to_ptr.vmem [resolvable:$true] %s270
          %276 = dma.hbm_to_vmem [thread:$0]  %s269, 256, %s271, %s258, 128, 128, 8
        $region32: #{tpu_custom_call.1} parent=15 // pred_fallthru
          _
      $region16: #{tpu_custom_call.1} parent=5 // pred_fallthru
        _
      %p277 = scmp.le.s32.totalorder 1, %s26
      %p278 = scmp.lt.s32.totalorder %s26, 3
      %p279 = pnand %p277, %p278
      %p280 = pneg %p279
      // Predicated region
      $region33: #{tpu_custom_call.1} parent=5 // pred_check
        _
      $region34: #{tpu_custom_call.1} parent=5 // pred_check_branch
        %282 = sbr.rel (%p279) target = $region36
      $region35: #{tpu_custom_call.1} parent=5 // pred_region
        %s283 = ssub.s32 %s26, 1
        %s284 = sand.u32 %s86, 1
        %s285 = scalar_lea.sflag [#allocation8], %s284
        %s286 = sand.u32 %s86, 1
        %s287 = smul.addr %s286, 16
        %s288 = scalar_lea.vmem [#allocation7], %s287
        // Predicated region
        $region37: #{tpu_custom_call.1} parent=35 // pred_check
          %p289 = pneg %p99
        $region38: #{tpu_custom_call.1} parent=35 // pred_check_branch
          %291 = sbr.rel (%p289) target = $region40
        $region39: #{tpu_custom_call.1} parent=35 // pred_region
          %292 = dma.done %s285, 256
        $region40: #{tpu_custom_call.1} parent=35 // pred_fallthru
          _
        %s293 = sand.u32 %s31, 1
        %s294 = scalar_lea.sflag [#allocation11], %s293
        %s295 = sand.u32 %s114, 1
        %s296 = smul.addr %s295, 16
        %s297 = scalar_lea.vmem [#allocation10], %s296
        // Predicated region
        $region41: #{tpu_custom_call.1} parent=35 // pred_check
          %p298 = pneg %p127
        $region42: #{tpu_custom_call.1} parent=35 // pred_check_branch
          %300 = sbr.rel (%p298) target = $region44
        $region43: #{tpu_custom_call.1} parent=35 // pred_region
          %301 = dma.done %s294, 256
        $region44: #{tpu_custom_call.1} parent=35 // pred_fallthru
          _
        %s302 = sand.u32 %s31, 1
        %s303 = scalar_lea.sflag [#allocation11], %s302
        %s304 = sand.u32 %s142, 1
        %s305 = smul.addr %s304, 16
        %s306 = scalar_lea.vmem [#allocation12], %s305
        // Predicated region
        $region45: #{tpu_custom_call.1} parent=35 // pred_check
          %p307 = pneg %p155
        $region46: #{tpu_custom_call.1} parent=35 // pred_check_branch
          %309 = sbr.rel (%p307) target = $region48
        $region47: #{tpu_custom_call.1} parent=35 // pred_region
          %310 = dma.done %s303, 256
        $region48: #{tpu_custom_call.1} parent=35 // pred_fallthru
          _
        %p311 = scmp.lt.s32.totalorder %s36, 1
        %s312 = scalar_select %p311, %s36, 1
        %s313 = scalar_lea.vmem %s1, %s312
        %p314 = pneg %p71
        %p315 = pneg %p68
        %s316 = sand.u32 %s86, 1
        %s317 = scalar_lea.sflag [#allocation8], %s316
        %s318 = sand.u32 %s86, 1
        %s319 = smul.addr %s318, 16
        %s320 = scalar_lea.vmem [#allocation7], %s319
        %p321 = pneg %p99
        %p322 = pneg %p96
        %s323 = sand.u32 %s31, 1
        %s324 = scalar_lea.sflag [#allocation11], %s323
        %s325 = sand.u32 %s114, 1
        %s326 = smul.addr %s325, 16
        %s327 = scalar_lea.vmem [#allocation10], %s326
        %p328 = pneg %p127
        %p329 = pneg %p124
        %s330 = sand.u32 %s31, 1
        %s331 = scalar_lea.sflag [#allocation11], %s330
        %s332 = sand.u32 %s142, 1
        %s333 = smul.addr %s332, 16
        %s334 = scalar_lea.vmem [#allocation12], %s333
        %p335 = pneg %p155
        %p336 = pneg %p152
        %p337 = pneg %p183
        %p338 = pneg %p180
        %s339 = sand.u32 %s170, 1
        %s340 = scalar_lea.sflag [#allocation9], %s339
        %s341 = sand.u32 %s170, 1
        %s342 = smul.addr %s341, 16
        %s343 = scalar_lea.vmem [#allocation13], %s342
        %p344 = scmp.lt.s32.totalorder %s36, 1
        %s345 = scalar_select %p344, %s36, 1
        %s346 = scalar_lea.vmem %s1, %s345
        %s347 = smul.u32 2, %s37
        %s348 = smul.u32 2, %s38
        %s349 = smul.u32 2, %s38
        %s350 = smul.u32 2, %s37
        %p351 = scmp.eq.s32.totalorder %s38, 0
        // Predicated region
        $region49: #{tpu_custom_call.1} parent=35 // pred_check
          %p352 = pneg %p351
        $region50: #{tpu_custom_call.1} parent=35 // pred_check_branch
          %354 = sbr.rel (%p352) target = $region52
        $region51: #{tpu_custom_call.1} parent=35 // pred_region
          %355 = vst [vmem:[#allocation2] sm:$0xff] -inf
          %356 = vst [vmem:[#allocation2 + $0x8] sm:$0xff] -inf
          %357 = vst [vmem:[#allocation2 + $0x10] sm:$0xff] -inf
          %358 = vst [vmem:[#allocation2 + $0x18] sm:$0xff] -inf
          %359 = vst [vmem:[#allocation3] sm:$0xff] 0.0
          %360 = vst [vmem:[#allocation3 + $0x8] sm:$0xff] 0.0
          %361 = vst [vmem:[#allocation3 + $0x10] sm:$0xff] 0.0
          %362 = vst [vmem:[#allocation3 + $0x18] sm:$0xff] 0.0
          %vm363 = vcmask 130048
          %364 = vst.msk [vmem:[#allocation4] sm:$0xff] %vm363, 0.0
          %365 = vst.msk [vmem:[#allocation4 + $0x8] sm:$0xff] %vm363, 0.0
          %366 = vst.msk [vmem:[#allocation4 + $0x10] sm:$0xff] %vm363, 0.0
          %367 = vst.msk [vmem:[#allocation4 + $0x18] sm:$0xff] %vm363, 0.0
        $region52: #{tpu_custom_call.1} parent=35 // pred_fallthru
          _
        %s368 = sshra.s32 %s38, 7
        %s369 = sand.u32 %s38, 127
        %s370 = sadd.s32 %s368, %s36
        %s371 = smul.u32 %s370, 128
        %s372 = sshra.s32 %s38, 7
        %s373 = sand.u32 %s38, 127
        %s374 = sadd.s32 %s371, %s373
        %s375 = sld [smem:[#allocation6 + %s374]]
        %p376 = scmp.gt.s32.totalorder %s375, 0
        // Predicated region
        $region53: #{tpu_custom_call.1} parent=35 // pred_check
          %p377 = pneg %p376
        $region54: #{tpu_custom_call.1} parent=35 // pred_check_branch
          %379 = sbr.rel (%p377) target = $region56
        $region55: #{tpu_custom_call.1} parent=35 // pred_region
          %s380 = scalar_lea.vmem %s346, %s38
          %v381 = vld [vmem:[%s380] sm:$0x1]
          %v382 = vld [vmem:[%s288] sm:$0xff]
          %v383 = vld [vmem:[%s288 + $0x8] sm:$0xff]
          %v384 = vld [vmem:[%s297] sm:$0xff]
          %v385 = vld [vmem:[%s297 + $0x8] sm:$0xff]
          %v386 = vld [vmem:[%s306] sm:$0xff]
          %v387 = vld [vmem:[%s306 + $0x8] sm:$0xff]
          %v389 = vlaneseq
          %v390 = vshrl.u32 %v389, 7
          %v391 = vsub.s32 0, %v390
          %v392 = vrot.slane %v381, %v391
          %vm394 = vcmask 130048
          %v396 = vsel %vm394, %v382, 0
          %v399 = vsel %vm394, %v383, 0
          %v402 = vsel %vm394, %v384, 0
          %v405 = vsel %vm394, %v385, 0
          %407 = vmatprep.subr.mxu0 0.0
          %408 = vmatpush1.xpose.msra.mxu0 %v402
          %409 = vmatprep.subr.mxu0 0.0
          %410 = vmatpush1.xpose.msra.mxu0 %v405
          %411 = vmatprep.subr.mxu0 0.0
          %412 = vmatpush1.xpose.msra.mxu0 0.0
          %413 = vmatprep.subr.mxu0 0.0
          %414 = vmatpush1.xpose.msra.mxu0 0.0
          %415 = vmatprep.subr.mxu0 0.0
          %416 = vmatpush1.xpose.msra.mxu0 0.0
          %417 = vmatprep.subr.mxu0 0.0
          %418 = vmatpush1.xpose.msra.mxu0 0.0
          %419 = vmatprep.subr.mxu0 0.0
          %420 = vmatpush1.xpose.msra.mxu0 0.0
          %421 = vmatprep.subr.mxu0 0.0
          %422 = vmatpush1.xpose.msra.mxu0 0.0
          %423 = vmatprep.subr.mxu0 0.0
          %424 = vmatpush1.xpose.msra.mxu0 0.0
          %425 = vmatprep.subr.mxu0 0.0
          %426 = vmatpush1.xpose.msra.mxu0 0.0
          %427 = vmatprep.subr.mxu0 0.0
          %428 = vmatpush1.xpose.msra.mxu0 0.0
          %429 = vmatprep.subr.mxu0 0.0
          %430 = vmatpush1.xpose.msra.mxu0 0.0
          %431 = vmatprep.subr.mxu0 0.0
          %432 = vmatpush1.xpose.msra.mxu0 0.0
          %433 = vmatprep.subr.mxu0 0.0
          %434 = vmatpush1.xpose.msra.mxu0 0.0
          %435 = vmatprep.subr.mxu0 0.0
          %436 = vmatpush1.xpose.msra.mxu0 0.0
          %437 = vmatprep.subr.mxu0 0.0
          %438 = vmatpush1.xpose.msra.mxu0 0.0
          %439 = vmatprep.subr.mxu0 0.0
          %440 = vmatpush1.xpose.msra.mxu0 0.0
          %441 = vmatprep.subr.mxu0 0.0
          %442 = vmatpush1.xpose.msra.mxu0 0.0
          %443 = vmatprep.subr.mxu0 0.0
          %444 = vmatpush1.xpose.msra.mxu0 0.0
          %445 = vmatprep.subr.mxu0 0.0
          %446 = vmatpush1.xpose.msra.mxu0 0.0
          %447 = vmatprep.subr.mxu0 0.0
          %448 = vmatpush1.xpose.msra.mxu0 0.0
          %449 = vmatprep.subr.mxu0 0.0
          %450 = vmatpush1.xpose.msra.mxu0 0.0
          %451 = vmatprep.subr.mxu0 0.0
          %452 = vmatpush1.xpose.msra.mxu0 0.0
          %453 = vmatprep.subr.mxu0 0.0
          %454 = vmatpush1.xpose.msra.mxu0 0.0
          %455 = vmatprep.subr.mxu0 0.0
          %456 = vmatpush1.xpose.msra.mxu0 0.0
          %457 = vmatprep.subr.mxu0 0.0
          %458 = vmatpush1.xpose.msra.mxu0 0.0
          %459 = vmatprep.subr.mxu0 0.0
          %460 = vmatpush1.xpose.msra.mxu0 0.0
          %461 = vmatprep.subr.mxu0 0.0
          %462 = vmatpush1.xpose.msra.mxu0 0.0
          %463 = vmatprep.subr.mxu0 0.0
          %464 = vmatpush1.xpose.msra.mxu0 0.0
          %465 = vmatprep.subr.mxu0 0.0
          %466 = vmatpush1.xpose.msra.mxu0 0.0
          %467 = vmatprep.subr.mxu0 0.0
          %468 = vmatpush1.xpose.msra.mxu0 0.0
          %469 = vmatprep.subr.mxu0 0.0
          %470 = vmatpush1.xpose.msra.mxu0 0.0
          %471 = vmatprep.mubr.f32.mxu0 0.0
          %472 = vmatmul.mubr.f32.gmra.mrb[0].mxu0 %v396
          %v473 = vpop.f32.mrb[0].mxu0
          %v474 = vadd.f32 %v392, %v473
          %v475 = vpop.f32.mrb[0].mxu0
          %476 = vmatprep.mubr.f32.mxu0 0.0
          %477 = vmatmul.mubr.f32.gmra.mrb[0].mxu0 %v399
          %v478 = vpop.f32.mrb[0].mxu0
          %v479 = vadd.f32 %v392, %v478
          %v480 = vpop.f32.mrb[0].mxu0
          %481 = vdwg.mxu0
          %v482 = vld [vmem:[#allocation2] sm:$0xff]
          %v483 = vld [vmem:[#allocation2 + $0x8] sm:$0xff]
          %v484 = vsel %vm394, %v474, -inf
          %485 = vmax.xlane.f32.xlu0 %v484
          %v486 = vpop.xlane.xlu0 %485
          %v487 = vsel %vm394, %v479, -inf
          %488 = vmax.xlane.f32.xlu0 %v487
          %v489 = vpop.xlane.xlu0 %488
          %v490 = vmax.f32 %v482, %v486
          %v491 = vmax.f32 %v483, %v489
          %v492 = vsub.f32 %v482, %v490
          %v493 = vsub.f32 %v483, %v491
          %v494 = vmul.f32 %v492, 1.442695
          %v495 = vpow.pop %v494
          %v496 = vmul.f32 %v493, 1.442695
          %v497 = vpow.pop %v496
          %499 = vset.pattern.permute.xlu0 0
          %500 = vperm.xlu0 %499, %v490
          %v501 = vpop.permute.xlu0 %500
          %504 = vset.pattern.permute.xlu0 0
          %505 = vperm.xlu0 %504, %v491
          %v506 = vpop.permute.xlu0 %505
          %v508 = vsub.f32 %v474, %v501
          %v509 = vsub.f32 %v479, %v506
          %v510 = vmul.f32 %v508, 1.442695
          %v511 = vpow.pop %v510
          %v512 = vmul.f32 %v509, 1.442695
          %v513 = vpow.pop %v512
          %v514 = vld [vmem:[#allocation3] sm:$0xff]
          %v515 = vld [vmem:[#allocation3 + $0x8] sm:$0xff]
          %v516 = vmul.f32 %v495, %v514
          %v517 = vmul.f32 %v497, %v515
          %v518 = vsel %vm394, %v511, 0.0
          %519 = vadd.xlane.f32.xlu0 %v518
          %v520 = vpop.xlane.xlu0 %519
          %v521 = vsel %vm394, %v513, 0.0
          %522 = vadd.xlane.f32.xlu0 %v521
          %v523 = vpop.xlane.xlu0 %522
          %v524 = vadd.f32 %v516, %v520
          %v525 = vadd.f32 %v517, %v523
          %526 = vst [vmem:[#allocation3] sm:$0xff] %v524
          %527 = vst [vmem:[#allocation3 + $0x8] sm:$0xff] %v525
          %v528 = vld [vmem:[#allocation4] sm:$0xff]
          %v529 = vld [vmem:[#allocation4 + $0x8] sm:$0xff]
          %531 = vset.pattern.permute.xlu0 0
          %532 = vperm.xlu0 %531, %v495
          %v533 = vpop.permute.xlu0 %532
          %536 = vset.pattern.permute.xlu0 0
          %537 = vperm.xlu0 %536, %v497
          %v538 = vpop.permute.xlu0 %537
          %v540 = vmul.f32 %v533, %v528
          %v541 = vmul.f32 %v538, %v529
          %v543 = vsel %vm394, %v511, 0
          %v546 = vsel %vm394, %v513, 0
          %548 = vmatprep.subr.mxu0 0.0
          %549 = vmatpush1.msra.mxu0 %v386
          %550 = vmatprep.subr.mxu0 0.0
          %551 = vmatpush1.msra.mxu0 %v387
          %552 = vmatprep.subr.mxu0 0.0
          %553 = vmatpush1.msra.mxu0 0.0
          %554 = vmatprep.subr.mxu0 0.0
          %555 = vmatpush1.msra.mxu0 0.0
          %556 = vmatprep.subr.mxu0 0.0
          %557 = vmatpush1.msra.mxu0 0.0
          %558 = vmatprep.subr.mxu0 0.0
          %559 = vmatpush1.msra.mxu0 0.0
          %560 = vmatprep.subr.mxu0 0.0
          %561 = vmatpush1.msra.mxu0 0.0
          %562 = vmatprep.subr.mxu0 0.0
          %563 = vmatpush1.msra.mxu0 0.0
          %564 = vmatprep.subr.mxu0 0.0
          %565 = vmatpush1.msra.mxu0 0.0
          %566 = vmatprep.subr.mxu0 0.0
          %567 = vmatpush1.msra.mxu0 0.0
          %568 = vmatprep.subr.mxu0 0.0
          %569 = vmatpush1.msra.mxu0 0.0
          %570 = vmatprep.subr.mxu0 0.0
          %571 = vmatpush1.msra.mxu0 0.0
          %572 = vmatprep.subr.mxu0 0.0
          %573 = vmatpush1.msra.mxu0 0.0
          %574 = vmatprep.subr.mxu0 0.0
          %575 = vmatpush1.msra.mxu0 0.0
          %576 = vmatprep.subr.mxu0 0.0
          %577 = vmatpush1.msra.mxu0 0.0
          %578 = vmatprep.subr.mxu0 0.0
          %579 = vmatpush1.msra.mxu0 0.0
          %580 = vmatprep.subr.mxu0 0.0
          %581 = vmatpush1.msra.mxu0 0.0
          %582 = vmatprep.subr.mxu0 0.0
          %583 = vmatpush1.msra.mxu0 0.0
          %584 = vmatprep.subr.mxu0 0.0
          %585 = vmatpush1.msra.mxu0 0.0
          %586 = vmatprep.subr.mxu0 0.0
          %587 = vmatpush1.msra.mxu0 0.0
          %588 = vmatprep.subr.mxu0 0.0
          %589 = vmatpush1.msra.mxu0 0.0
          %590 = vmatprep.subr.mxu0 0.0
          %591 = vmatpush1.msra.mxu0 0.0
          %592 = vmatprep.subr.mxu0 0.0
          %593 = vmatpush1.msra.mxu0 0.0
          %594 = vmatprep.subr.mxu0 0.0
          %595 = vmatpush1.msra.mxu0 0.0
          %596 = vmatprep.subr.mxu0 0.0
          %597 = vmatpush1.msra.mxu0 0.0
          %598 = vmatprep.subr.mxu0 0.0
          %599 = vmatpush1.msra.mxu0 0.0
          %600 = vmatprep.subr.mxu0 0.0
          %601 = vmatpush1.msra.mxu0 0.0
          %602 = vmatprep.subr.mxu0 0.0
          %603 = vmatpush1.msra.mxu0 0.0
          %604 = vmatprep.subr.mxu0 0.0
          %605 = vmatpush1.msra.mxu0 0.0
          %606 = vmatprep.subr.mxu0 0.0
          %607 = vmatpush1.msra.mxu0 0.0
          %608 = vmatprep.subr.mxu0 0.0
          %609 = vmatpush1.msra.mxu0 0.0
          %610 = vmatprep.subr.mxu0 0.0
          %611 = vmatpush1.msra.mxu0 0.0
          %612 = vmatprep.mubr.f32.mxu0 0.0
          %613 = vmatmul.mubr.f32.gmra.mrb[0].mxu0 %v543
          %v614 = vpop.f32.mrb[0].mxu0
          %v615 = vadd.f32 0.0, %v614
          %v616 = vpop.f32.mrb[0].mxu0
          %617 = vmatprep.mubr.f32.mxu0 0.0
          %618 = vmatmul.mubr.f32.gmra.mrb[0].mxu0 %v546
          %v619 = vpop.f32.mrb[0].mxu0
          %v620 = vadd.f32 0.0, %v619
          %v621 = vpop.f32.mrb[0].mxu0
          %622 = vdwg.mxu0
          %v623 = vadd.f32 %v540, %v615
          %v624 = vadd.f32 %v541, %v620
          %625 = vst.msk [vmem:[#allocation4] sm:$0xff] %vm394, %v623
          %626 = vst.msk [vmem:[#allocation4 + $0x8] sm:$0xff] %vm394, %v624
          %627 = vst [vmem:[#allocation2] sm:$0xff] %v490
          %628 = vst [vmem:[#allocation2 + $0x8] sm:$0xff] %v491
          %v629 = vld [vmem:[%s288] sm:$0xff]
          %v630 = vld [vmem:[%s288 + $0x8] sm:$0xff]
          %v631 = vld [vmem:[%s297] sm:$0xff]
          %v632 = vld [vmem:[%s297 + $0x8] sm:$0xff]
          %v633 = vld [vmem:[%s306] sm:$0xff]
          %v634 = vld [vmem:[%s306 + $0x8] sm:$0xff]
          %637 = vrot.lane.b32.xlu0 %v629, 112
          %v638 = vpop.permute.xlu0 %637
          %639 = vrot.lane.b32.xlu0 %v630, 112
          %v640 = vpop.permute.xlu0 %639
          %643 = vrot.lane.b32.xlu0 %v631, 112
          %v644 = vpop.permute.xlu0 %643
          %645 = vrot.lane.b32.xlu0 %v632, 112
          %v646 = vpop.permute.xlu0 %645
          %v647 = vsel %vm394, %v638, 0
          %v649 = vsel %vm394, %v640, 0
          %v651 = vsel %vm394, %v644, 0
          %v653 = vsel %vm394, %v646, 0
          %655 = vmatprep.subr.mxu0 0.0
          %656 = vmatpush1.xpose.msra.mxu0 %v651
          %657 = vmatprep.subr.mxu0 0.0
          %658 = vmatpush1.xpose.msra.mxu0 %v653
          %659 = vmatprep.subr.mxu0 0.0
          %660 = vmatpush1.xpose.msra.mxu0 0.0
          %661 = vmatprep.subr.mxu0 0.0
          %662 = vmatpush1.xpose.msra.mxu0 0.0
          %663 = vmatprep.subr.mxu0 0.0
          %664 = vmatpush1.xpose.msra.mxu0 0.0
          %665 = vmatprep.subr.mxu0 0.0
          %666 = vmatpush1.xpose.msra.mxu0 0.0
          %667 = vmatprep.subr.mxu0 0.0
          %668 = vmatpush1.xpose.msra.mxu0 0.0
          %669 = vmatprep.subr.mxu0 0.0
          %670 = vmatpush1.xpose.msra.mxu0 0.0
          %671 = vmatprep.subr.mxu0 0.0
          %672 = vmatpush1.xpose.msra.mxu0 0.0
          %673 = vmatprep.subr.mxu0 0.0
          %674 = vmatpush1.xpose.msra.mxu0 0.0
          %675 = vmatprep.subr.mxu0 0.0
          %676 = vmatpush1.xpose.msra.mxu0 0.0
          %677 = vmatprep.subr.mxu0 0.0
          %678 = vmatpush1.xpose.msra.mxu0 0.0
          %679 = vmatprep.subr.mxu0 0.0
          %680 = vmatpush1.xpose.msra.mxu0 0.0
          %681 = vmatprep.subr.mxu0 0.0
          %682 = vmatpush1.xpose.msra.mxu0 0.0
          %683 = vmatprep.subr.mxu0 0.0
          %684 = vmatpush1.xpose.msra.mxu0 0.0
          %685 = vmatprep.subr.mxu0 0.0
          %686 = vmatpush1.xpose.msra.mxu0 0.0
          %687 = vmatprep.subr.mxu0 0.0
          %688 = vmatpush1.xpose.msra.mxu0 0.0
          %689 = vmatprep.subr.mxu0 0.0
          %690 = vmatpush1.xpose.msra.mxu0 0.0
          %691 = vmatprep.subr.mxu0 0.0
          %692 = vmatpush1.xpose.msra.mxu0 0.0
          %693 = vmatprep.subr.mxu0 0.0
          %694 = vmatpush1.xpose.msra.mxu0 0.0
          %695 = vmatprep.subr.mxu0 0.0
          %696 = vmatpush1.xpose.msra.mxu0 0.0
          %697 = vmatprep.subr.mxu0 0.0
          %698 = vmatpush1.xpose.msra.mxu0 0.0
          %699 = vmatprep.subr.mxu0 0.0
          %700 = vmatpush1.xpose.msra.mxu0 0.0
          %701 = vmatprep.subr.mxu0 0.0
          %702 = vmatpush1.xpose.msra.mxu0 0.0
          %703 = vmatprep.subr.mxu0 0.0
          %704 = vmatpush1.xpose.msra.mxu0 0.0
          %705 = vmatprep.subr.mxu0 0.0
          %706 = vmatpush1.xpose.msra.mxu0 0.0
          %707 = vmatprep.subr.mxu0 0.0
          %708 = vmatpush1.xpose.msra.mxu0 0.0
          %709 = vmatprep.subr.mxu0 0.0
          %710 = vmatpush1.xpose.msra.mxu0 0.0
          %711 = vmatprep.subr.mxu0 0.0
          %712 = vmatpush1.xpose.msra.mxu0 0.0
          %713 = vmatprep.subr.mxu0 0.0
          %714 = vmatpush1.xpose.msra.mxu0 0.0
          %715 = vmatprep.subr.mxu0 0.0
          %716 = vmatpush1.xpose.msra.mxu0 0.0
          %717 = vmatprep.subr.mxu0 0.0
          %718 = vmatpush1.xpose.msra.mxu0 0.0
          %719 = vmatprep.mubr.f32.mxu0 0.0
          %720 = vmatmul.mubr.f32.gmra.mrb[0].mxu0 %v647
          %v721 = vpop.f32.mrb[0].mxu0
          %v722 = vadd.f32 %v392, %v721
          %v723 = vpop.f32.mrb[0].mxu0
          %724 = vmatprep.mubr.f32.mxu0 0.0
          %725 = vmatmul.mubr.f32.gmra.mrb[0].mxu0 %v649
          %v726 = vpop.f32.mrb[0].mxu0
          %v727 = vadd.f32 %v392, %v726
          %v728 = vpop.f32.mrb[0].mxu0
          %729 = vdwg.mxu0
          %s730 = scalar_lea.vmem [#allocation2], 16
          %v731 = vld [vmem:[%s730] sm:$0xff]
          %v732 = vld [vmem:[%s730 + $0x8] sm:$0xff]
          %v733 = vsel %vm394, %v722, -inf
          %734 = vmax.xlane.f32.xlu0 %v733
          %v735 = vpop.xlane.xlu0 %734
          %v736 = vsel %vm394, %v727, -inf
          %737 = vmax.xlane.f32.xlu0 %v736
          %v738 = vpop.xlane.xlu0 %737
          %v739 = vmax.f32 %v731, %v735
          %v740 = vmax.f32 %v732, %v738
          %v741 = vsub.f32 %v731, %v739
          %v742 = vsub.f32 %v732, %v740
          %v743 = vmul.f32 %v741, 1.442695
          %v744 = vpow.pop %v743
          %v745 = vmul.f32 %v742, 1.442695
          %v746 = vpow.pop %v745
          %748 = vset.pattern.permute.xlu0 0
          %749 = vperm.xlu0 %748, %v739
          %v750 = vpop.permute.xlu0 %749
          %753 = vset.pattern.permute.xlu0 0
          %754 = vperm.xlu0 %753, %v740
          %v755 = vpop.permute.xlu0 %754
          %v757 = vsub.f32 %v722, %v750
          %v758 = vsub.f32 %v727, %v755
          %v759 = vmul.f32 %v757, 1.442695
          %v760 = vpow.pop %v759
          %v761 = vmul.f32 %v758, 1.442695
          %v762 = vpow.pop %v761
          %s763 = scalar_lea.vmem [#allocation3], 16
          %v764 = vld [vmem:[%s763] sm:$0xff]
          %v765 = vld [vmem:[%s763 + $0x8] sm:$0xff]
          %v766 = vmul.f32 %v744, %v764
          %v767 = vmul.f32 %v746, %v765
          %v768 = vsel %vm394, %v760, 0.0
          %769 = vadd.xlane.f32.xlu0 %v768
          %v770 = vpop.xlane.xlu0 %769
          %v771 = vsel %vm394, %v762, 0.0
          %772 = vadd.xlane.f32.xlu0 %v771
          %v773 = vpop.xlane.xlu0 %772
          %v774 = vadd.f32 %v766, %v770
          %v775 = vadd.f32 %v767, %v773
          %776 = vst [vmem:[%s763] sm:$0xff] %v774
          %777 = vst [vmem:[%s763 + $0x8] sm:$0xff] %v775
          %s778 = scalar_lea.vmem [#allocation4], 16
          %v779 = vld [vmem:[%s778] sm:$0xff]
          %v780 = vld [vmem:[%s778 + $0x8] sm:$0xff]
          %782 = vset.pattern.permute.xlu0 0
          %783 = vperm.xlu0 %782, %v744
          %v784 = vpop.permute.xlu0 %783
          %787 = vset.pattern.permute.xlu0 0
          %788 = vperm.xlu0 %787, %v746
          %v789 = vpop.permute.xlu0 %788
          %v791 = vmul.f32 %v784, %v779
          %v792 = vmul.f32 %v789, %v780
          %795 = vrot.lane.b32.xlu0 %v633, 112
          %v796 = vpop.permute.xlu0 %795
          %797 = vrot.lane.b32.xlu0 %v634, 112
          %v798 = vpop.permute.xlu0 %797
          %v802 = vsel %vm394, %v760, 0
          %v805 = vsel %vm394, %v762, 0
          %807 = vmatprep.subr.mxu0 0.0
          %808 = vmatpush1.msra.mxu0 %v796
          %809 = vmatprep.subr.mxu0 0.0
          %810 = vmatpush1.msra.mxu0 %v798
          %811 = vmatprep.subr.mxu0 0.0
          %812 = vmatpush1.msra.mxu0 0.0
          %813 = vmatprep.subr.mxu0 0.0
          %814 = vmatpush1.msra.mxu0 0.0
          %815 = vmatprep.subr.mxu0 0.0
          %816 = vmatpush1.msra.mxu0 0.0
          %817 = vmatprep.subr.mxu0 0.0
          %818 = vmatpush1.msra.mxu0 0.0
          %819 = vmatprep.subr.mxu0 0.0
          %820 = vmatpush1.msra.mxu0 0.0
          %821 = vmatprep.subr.mxu0 0.0
          %822 = vmatpush1.msra.mxu0 0.0
          %823 = vmatprep.subr.mxu0 0.0
          %824 = vmatpush1.msra.mxu0 0.0
          %825 = vmatprep.subr.mxu0 0.0
          %826 = vmatpush1.msra.mxu0 0.0
          %827 = vmatprep.subr.mxu0 0.0
          %828 = vmatpush1.msra.mxu0 0.0
          %829 = vmatprep.subr.mxu0 0.0
          %830 = vmatpush1.msra.mxu0 0.0
          %831 = vmatprep.subr.mxu0 0.0
          %832 = vmatpush1.msra.mxu0 0.0
          %833 = vmatprep.subr.mxu0 0.0
          %834 = vmatpush1.msra.mxu0 0.0
          %835 = vmatprep.subr.mxu0 0.0
          %836 = vmatpush1.msra.mxu0 0.0
          %837 = vmatprep.subr.mxu0 0.0
          %838 = vmatpush1.msra.mxu0 0.0
          %839 = vmatprep.subr.mxu0 0.0
          %840 = vmatpush1.msra.mxu0 0.0
          %841 = vmatprep.subr.mxu0 0.0
          %842 = vmatpush1.msra.mxu0 0.0
          %843 = vmatprep.subr.mxu0 0.0
          %844 = vmatpush1.msra.mxu0 0.0
          %845 = vmatprep.subr.mxu0 0.0
          %846 = vmatpush1.msra.mxu0 0.0
          %847 = vmatprep.subr.mxu0 0.0
          %848 = vmatpush1.msra.mxu0 0.0
          %849 = vmatprep.subr.mxu0 0.0
          %850 = vmatpush1.msra.mxu0 0.0
          %851 = vmatprep.subr.mxu0 0.0
          %852 = vmatpush1.msra.mxu0 0.0
          %853 = vmatprep.subr.mxu0 0.0
          %854 = vmatpush1.msra.mxu0 0.0
          %855 = vmatprep.subr.mxu0 0.0
          %856 = vmatpush1.msra.mxu0 0.0
          %857 = vmatprep.subr.mxu0 0.0
          %858 = vmatpush1.msra.mxu0 0.0
          %859 = vmatprep.subr.mxu0 0.0
          %860 = vmatpush1.msra.mxu0 0.0
          %861 = vmatprep.subr.mxu0 0.0
          %862 = vmatpush1.msra.mxu0 0.0
          %863 = vmatprep.subr.mxu0 0.0
          %864 = vmatpush1.msra.mxu0 0.0
          %865 = vmatprep.subr.mxu0 0.0
          %866 = vmatpush1.msra.mxu0 0.0
          %867 = vmatprep.subr.mxu0 0.0
          %868 = vmatpush1.msra.mxu0 0.0
          %869 = vmatprep.subr.mxu0 0.0
          %870 = vmatpush1.msra.mxu0 0.0
          %871 = vmatprep.mubr.f32.mxu0 0.0
          %872 = vmatmul.mubr.f32.gmra.mrb[0].mxu0 %v802
          %v873 = vpop.f32.mrb[0].mxu0
          %v874 = vadd.f32 0.0, %v873
          %v875 = vpop.f32.mrb[0].mxu0
          %876 = vmatprep.mubr.f32.mxu0 0.0
          %877 = vmatmul.mubr.f32.gmra.mrb[0].mxu0 %v805
          %v878 = vpop.f32.mrb[0].mxu0
          %v879 = vadd.f32 0.0, %v878
          %v880 = vpop.f32.mrb[0].mxu0
          %881 = vdwg.mxu0
          %v882 = vadd.f32 %v791, %v874
          %v883 = vadd.f32 %v792, %v879
          %884 = vst.msk [vmem:[%s778] sm:$0xff] %vm394, %v882
          %885 = vst.msk [vmem:[%s778 + $0x8] sm:$0xff] %vm394, %v883
          %886 = vst [vmem:[%s730] sm:$0xff] %v739
          %887 = vst [vmem:[%s730 + $0x8] sm:$0xff] %v740
        $region56: #{tpu_custom_call.1} parent=35 // pred_fallthru
          _
        // Predicated region
        $region57: #{tpu_custom_call.1} parent=35 // pred_check
          %p888 = pneg %p351
        $region58: #{tpu_custom_call.1} parent=35 // pred_check_branch
          %890 = sbr.rel (%p888) target = $region60
        $region59: #{tpu_custom_call.1} parent=35 // pred_region
          %v891 = vld [vmem:[#allocation3] sm:$0xff]
          %v892 = vld [vmem:[#allocation3 + $0x8] sm:$0xff]
          %v893 = vrcp.pop %v891
          %v894 = vrcp.pop %v892
          %v895 = vld [vmem:[#allocation4] sm:$0xff]
          %v896 = vld [vmem:[#allocation4 + $0x8] sm:$0xff]
          %898 = vset.pattern.permute.xlu0 0
          %899 = vperm.xlu0 %898, %v893
          %v900 = vpop.permute.xlu0 %899
          %903 = vset.pattern.permute.xlu0 0
          %904 = vperm.xlu0 %903, %v894
          %v905 = vpop.permute.xlu0 %904
          %v907 = vmul.f32 %v895, %v900
          %v908 = vmul.f32 %v896, %v905
          %s909 = scalar_lea.vmem [#allocation3], 16
          %v910 = vld [vmem:[%s909] sm:$0xff]
          %v911 = vld [vmem:[%s909 + $0x8] sm:$0xff]
          %v912 = vrcp.pop %v910
          %v913 = vrcp.pop %v911
          %s914 = scalar_lea.vmem [#allocation4], 16
          %v915 = vld [vmem:[%s914] sm:$0xff]
          %v916 = vld [vmem:[%s914 + $0x8] sm:$0xff]
          %918 = vset.pattern.permute.xlu0 0
          %919 = vperm.xlu0 %918, %v912
          %v920 = vpop.permute.xlu0 %919
          %923 = vset.pattern.permute.xlu0 0
          %924 = vperm.xlu0 %923, %v913
          %v925 = vpop.permute.xlu0 %924
          %v927 = vmul.f32 %v915, %v920
          %v928 = vmul.f32 %v916, %v925
          %931 = vrot.lane.b32.xlu0 %v927, 16
          %v932 = vpop.permute.xlu0 %931
          %933 = vrot.lane.b32.xlu0 %v928, 16
          %v934 = vpop.permute.xlu0 %933
          %vm937 = vcmask 130048
          %v938 = vsel %vm937, %v907, %v932
          %v939 = vsel %vm937, %v908, %v934
          %vm940 = vcmask 261120
          %941 = vst.msk [vmem:[%s343] sm:$0xff] %vm940, %v938
          %942 = vst.msk [vmem:[%s343 + $0x8] sm:$0xff] %vm940, %v939
        $region60: #{tpu_custom_call.1} parent=35 // pred_fallthru
          _
        %s943 = sand.u32 %s170, 1
        %s944 = scalar_lea.sflag [#allocation9], %s943
        %s945 = sand.u32 %s170, 1
        %s946 = smul.addr %s945, 16
        %s947 = scalar_lea.vmem [#allocation13], %s946
        // Predicated region
        $region61: #{tpu_custom_call.1} parent=35 // pred_check
          %p948 = pneg %p180
        $region62: #{tpu_custom_call.1} parent=35 // pred_check_branch
          %950 = sbr.rel (%p948) target = $region64
        $region63: #{tpu_custom_call.1} parent=35 // pred_region
          %s951 = smul.u32 2, %s37
          %s953 = ssub.s32 256, 256
          %954 = vsyncadd %s944, %s953
          %s955 = smul.addr %s36, 2
          %s956 = sadd.s32 %s951, %s955
          %s957 = smul.addr %s956, 128
          %s958 = scalar_lea.hbm %s5, %s957
          %s959 = sshll.u32 %s947, 4
          %s960 = int_to_ptr.vmem [resolvable:$true] %s959
          %965 = dma.vmem_to_hbm [thread:$0]  %s960, 256, %s958, %s944, 128, 128, 8
        $region64: #{tpu_custom_call.1} parent=35 // pred_fallthru
          _
      $region36: #{tpu_custom_call.1} parent=5 // pred_fallthru
        _
      %p966 = scmp.le.s32.totalorder 2, %s26
      // Predicated region
      $region65: #{tpu_custom_call.1} parent=5 // pred_check
        %p967 = pneg %p966
      $region66: #{tpu_custom_call.1} parent=5 // pred_check_branch
        %969 = sbr.rel (%p967) target = $region68
      $region67: #{tpu_custom_call.1} parent=5 // pred_region
        %s970 = ssub.s32 %s26, 2
        // Predicated region
        $region69: #{tpu_custom_call.1} parent=67 // pred_check
          %p971 = pneg %p186
        $region70: #{tpu_custom_call.1} parent=67 // pred_check_branch
          %973 = sbr.rel (%p971) target = $region72
        $region71: #{tpu_custom_call.1} parent=67 // pred_region
          %s974 = sand.u32 %s171, 1
          %s975 = scalar_lea.sflag [#allocation9], %s974
          %s976 = sand.u32 %s171, 1
          %s977 = smul.addr %s976, 16
          %s978 = scalar_lea.vmem [#allocation13], %s977
          %979 = dma.done %s975, 256
        $region72: #{tpu_custom_call.1} parent=67 // pred_fallthru
          _
      $region68: #{tpu_custom_call.1} parent=5 // pred_fallthru
        _
    $region6: #{tpu_custom_call.1} parent=1 // loop_footer
      %s30 = sadd.s32 1, %s26
    $region7: #{tpu_custom_call.1} parent=1 // loop_footer_branch
      %25 = sbr.rel target = $region3
    $region8: #{tpu_custom_call.1} parent=1 // loop_exit
      _
    %980 = vsyncpa [#allocation8], 1
    %s981 = scalar_lea.sflag [#allocation8], 1
    %982 = vsyncpa %s981, 1
    %983 = vsyncpa [#allocation11], 1
    %s984 = scalar_lea.sflag [#allocation11], 1
    %985 = vsyncpa %s984, 1
    %986 = vsyncpa [#allocation9], 1
    %s987 = scalar_lea.sflag [#allocation9], 1
    %988 = vsyncpa %s987, 1

</llo_original>
